<compile_context>
chip_gen: v7x
topology: tpu7x:2x2x1
jax: 0.10.0
libtpu: 0.0.40
codegen_flags: <defaults>
</compile_context>

<pallas_src>
import functools
import math

import jax
import jax.numpy as jnp
from jax.experimental import pallas as pl
from jax.experimental.pallas import tpu as pltpu


_TM_CAP = 512  # row-tile cap; sweep 512-2048 on real workloads


def _choose_tm(m):
    tm = (m + 1) // 2            # >= 2 grid steps when possible (v7x: 2 TensorCores)
    tm = ((tm + 7) // 8) * 8     # sublane multiple of 8
    return max(8, min(_TM_CAP, tm))


# ----------------------------------------------------------------------------
# Fused Pallas kernel: the whole LocalResidual forward in one call.
# ----------------------------------------------------------------------------
def _local_residual_kernel(
    x_a_ref, x_v_ref,
    w1_ref, w2_ref, w3_ref, gr_ref, gem_ref, ges_ref, nv_ref, ev_ref, bias_ref,
    out_ref,
    *, adim, vdim, rank, agroups, vgroups):
    f32 = jnp.float32
    A, V3, R, R3 = adim, 3 * vdim, rank, 3 * rank
    ag = agroups

    def mm(a, w_ref):                           # MXU matmul, f32 accumulation
        w = w_ref[...]
        return jnp.dot(a.astype(w.dtype), w, preferred_element_type=f32)

    def leaky(z):                               # LeakyReLU(0.2)
        return jnp.where(z >= 0, z, 0.2 * z)

    def vec_root_s(g):                          # NOTE(assumed) v * (1+|v|^2)^(-1/4)
        nsq = mm(g * g, nv_ref)                 # per-feature |v|^2 via indicator matmul
        s = jax.lax.rsqrt(jnp.sqrt(1.0 + nsq))  # native EUP sqrt+rsqrt, no pow
        return g * mm(s, ev_ref)                # broadcast over 3 comps via MXU

    xa = x_a_ref[...].astype(f32)               # (TM, adim)
    xv = x_v_ref[...].astype(f32)               # (TM, 3*vdim) interleaved (feat*3+comp)
    xin = jnp.concatenate([xa, xv], axis=-1)    # (TM, adim+3*vdim)
    b_all = bias_ref[...]                       # (4, adim+3*vdim) f32

    # ---- stage 1: one fused matmul ------------------------------------------
    s1 = mm(xin, w1_ref)                        # (TM, A+V3+2*R3+2*R+R3)
    o = A + V3
    h1p, g1p = s1[:, :A], s1[:, A:o]
    vl, vr = s1[:, o:o + R3], s1[:, o + R3:o + 2 * R3]
    o += 2 * R3
    al, ar, alb = s1[:, o:o + R], s1[:, o + R:o + 2 * R], s1[:, o + 2 * R:]
    h1 = leaky(h1p + b_all[0:1, :A])
    g1 = vec_root_s(g1p)

    # ---- stage 2 --------------------------------------------------------------
    s2 = mm(jnp.concatenate([h1, g1], axis=-1), w2_ref)     # (TM, A+V3)
    h2 = leaky(s2[:, :A] + b_all[1:2, :A])
    g2 = vec_root_s(s2[:, A:])

    # ---- ScalVecProducts elementwise pieces (matmul parts folded into W1/W3) --
    aa, vlvr, av = al * ar, vl * vr, alb * vr

    # ---- stage 3: [y_a + p_a | y_v + p_v] in one matmul -----------------------
    s3 = mm(jnp.concatenate([h2, g2, aa, vlvr, av], axis=-1), w3_ref)
    sasv = s3 + b_all[2:3, :]                   # adds b2 to scalar cols (vec cols 0)

    # ---- fused ScalGroupNorm + VecGroupNorm epilogue --------------------------
    red = mm(jnp.concatenate([sasv, sasv * sasv], axis=-1), gr_ref)   # (TM, 2ag+vg)
    mean_a = red[:, :ag]
    var_a = jnp.maximum(red[:, ag:2 * ag] - mean_a * mean_a, 0.0)     # E[x^2]-mean^2
    inv_a = jax.lax.rsqrt(var_a + 1e-5)
    inv_v = jax.lax.rsqrt(red[:, 2 * ag:] + 1e-5)
    stats = jnp.concatenate([mean_a, inv_a, inv_v], axis=-1)          # (TM, 2ag+vg)
    mean_full = mm(stats, gem_ref)              # [group-mean bcast | 0]
    scale_full = mm(stats, ges_ref)             # [inv_a*gamma_a | inv_v*gamma_v] bcast
    z = (sasv - mean_full) * scale_full + b_all[3:4, :]
    out_ref[...] = (xin + z).astype(out_ref.dtype)


# ----------------------------------------------------------------------------
# One-time weight packing (block-structured fused weights, interleaved layout)
# ----------------------------------------------------------------------------
def pack_local_residual_params(p, cfg, dtype=jnp.bfloat16):
    adim, vdim, rank = cfg["adim"], cfg["vdim"], cfg["rank"]
    ag, vg = cfg["agroups"], cfg["vgroups"]
    A, V3, R, R3 = adim, 3 * vdim, rank, 3 * rank
    gpA, gpV = adim // ag, vdim // vg
    f32 = jnp.float32
    eye3 = jnp.eye(3, dtype=f32)

    def kron3(W):          # VecLinear weight (dout, din) -> interleaved (3*din, 3*dout)
        return jnp.kron(W.T.astype(f32), eye3)

    def brd3(n):           # (n, 3n): feature -> 3-component broadcast (interleaved)
        return jnp.kron(jnp.eye(n, dtype=f32), jnp.ones((1, 3), f32))

    def red3(n):           # (3n, n): sum over the 3 components of each feature
        return jnp.kron(jnp.eye(n, dtype=f32), jnp.ones((3, 1), f32))

    s = p["svp"]

    # stage 1: [xa | xv] -> [h1p | g1p | v_l | v_r | a_l | a_r | a_l_bcast]
    W1 = jnp.zeros((A + V3, A + V3 + 2 * R3 + 2 * R + R3), f32)
    c = 0
    W1 = W1.at[:A, c:c + A].set(p["a0"]["W"].T); c += A
    W1 = W1.at[A:, c:c + V3].set(kron3(p["v0"]["W"])); c += V3
    W1 = W1.at[A:, c:c + R3].set(kron3(s["v_l"]["W"])); c += R3
    W1 = W1.at[A:, c:c + R3].set(kron3(s["v_r"]["W"])); c += R3
    W1 = W1.at[:A, c:c + R].set(s["a_l"]["W"].T); c += R
    W1 = W1.at[:A, c:c + R].set(s["a_r"]["W"].T); c += R
    W1 = W1.at[:A, c:c + R3].set(s["a_l"]["W"].T @ brd3(R)); c += R3

    # stage 2: [h1 | g1] -> [h2p | g2p]
    W2 = jnp.zeros((A + V3, A + V3), f32)
    W2 = W2.at[:A, :A].set(p["a1"]["W"].T)
    W2 = W2.at[A:, A:].set(kron3(p["v1"]["W"]))

    # stage 3: [h2 | g2 | aa | vl*vr | av] -> [y_a + p_a | y_v + p_v]
    W3 = jnp.zeros((A + V3 + R + 2 * R3, A + V3), f32)
    r = 0
    W3 = W3.at[r:r + A, :A].set(p["a2"]["W"].T); r += A
    W3 = W3.at[r:r + V3, A:].set(kron3(p["v2"]["W"])); r += V3
    W3 = W3.at[r:r + R, :A].set(s["aa"]["W"].T); r += R
    W3 = W3.at[r:r + R3, :A].set(red3(R) @ s["vv"]["W"].T); r += R3   # vv-reduce folded
    W3 = W3.at[r:r + R3, A:].set(kron3(s["av"]["W"])); r += R3

    # group-norm reduce/expand matrices (gamma folded into the expand columns)
    ga_avg = jnp.kron(jnp.eye(ag, dtype=f32), jnp.ones((gpA, 1), f32)) / gpA   # (A, ag)
    ga_exp = jnp.kron(jnp.eye(ag, dtype=f32), jnp.ones((1, gpA), f32))         # (ag, A)
    mv_avg = jnp.kron(jnp.eye(vg, dtype=f32), jnp.ones((3 * gpV, 1), f32)) / gpV  # (V3, vg)
    gv_exp = jnp.kron(jnp.eye(vg, dtype=f32), jnp.ones((1, 3 * gpV), f32))        # (vg, V3)

    GR = jnp.zeros((2 * (A + V3), 2 * ag + vg), f32)       # input [s | s^2]
    GR = GR.at[:A, :ag].set(ga_avg)                        # mean_a
    GR = GR.at[A + V3:A + V3 + A, ag:2 * ag].set(ga_avg)   # E[s_a^2]
    GR = GR.at[A + V3 + A:, 2 * ag:].set(mv_avg)           # E[|v|^2]

    gamma_a = p["gn_a"]["gamma"].astype(f32)
    gamma_v_int = jnp.repeat(p["gn_v"]["gamma"].astype(f32), 3)        # interleaved

    GEm = jnp.zeros((2 * ag + vg, A + V3), f32)
    GEm = GEm.at[:ag, :A].set(ga_exp)                                  # mean broadcast
    GEs = jnp.zeros((2 * ag + vg, A + V3), f32)
    GEs = GEs.at[ag:2 * ag, :A].set(ga_exp * gamma_a[None, :])         # inv_a * gamma_a
    GEs = GEs.at[2 * ag:, A:].set(gv_exp * gamma_v_int[None, :])       # inv_v * gamma_v

    NV = red3(vdim)        # (V3, vdim): per-feature |v|^2 reduce (VecRootS)
    EV = brd3(vdim)        # (vdim, V3): per-feature scale broadcast (VecRootS)

    bias = jnp.zeros((4, A + V3), f32)          # [b0 | b1 | b2 | beta], vec cols zero
    bias = bias.at[0, :A].set(p["a0"]["b"])
    bias = bias.at[1, :A].set(p["a1"]["b"])
    bias = bias.at[2, :A].set(p["a2"]["b"])
    bias = bias.at[3, :A].set(p["gn_a"]["beta"])

    cast = lambda w: w.astype(dtype)
    return dict(W1=cast(W1), W2=cast(W2), W3=cast(W3), GR=cast(GR),
                GEm=cast(GEm), GEs=cast(GEs), NV=cast(NV), EV=cast(EV), bias=bias)


# ----------------------------------------------------------------------------
# Forward wrapper (single fused pallas_call, no wrapper transposes/pads)
# ----------------------------------------------------------------------------
def local_residual_forward(packed, x_a, x_v, cfg):
    adim, vdim, rank = cfg["adim"], cfg["vdim"], cfg["rank"]
    ag, vg = cfg["agroups"], cfg["vgroups"]
    A, V3 = adim, 3 * vdim
    B, N = x_a.shape[0], x_a.shape[1]
    M = B * N

    xa2 = x_a.reshape(M, A)
    xv2 = x_v.reshape(M, V3)                    # interleaved (feat*3+comp): free reshape

    TM = _choose_tm(M)
    grid = (pl.cdiv(M, TM),)                    # ragged last block handled by Pallas

    weights = (packed["W1"], packed["W2"], packed["W3"], packed["GR"],
               packed["GEm"], packed["GEs"], packed["NV"], packed["EV"],
               packed["bias"])

    def row_spec(ncols):
        return pl.BlockSpec((TM, ncols), lambda i: (i, 0))

    def const_spec(a):
        return pl.BlockSpec(a.shape, lambda i: (0,) * a.ndim)

    kernel = functools.partial(_local_residual_kernel, adim=adim, vdim=vdim,
                               rank=rank, agroups=ag, vgroups=vg)

    out = pl.pallas_call(
        kernel,
        grid=grid,
        in_specs=[row_spec(A), row_spec(V3)] + [const_spec(w) for w in weights],
        out_specs=row_spec(A + V3),
        out_shape=jax.ShapeDtypeStruct((M, A + V3), x_a.dtype),
        compiler_params=pltpu.CompilerParams(
            dimension_semantics=("parallel",),
            vmem_limit_bytes=48 * 1024 * 1024),
    )(xa2, xv2, *weights)

    y_a = out[:, :A].reshape(B, N, A)
    y_v = out[:, A:].reshape(B, N, vdim, 3)
    return y_a, y_v


# ----------------------------------------------------------------------------
# Pure-JAX reference (same NOTE(assumed) sub-module semantics)
# ----------------------------------------------------------------------------
def _reference_forward(p, x_a, x_v, cfg):
    adim, vdim = cfg["adim"], cfg["vdim"]
    ag, vg = cfg["agroups"], cfg["vgroups"]

    def leaky(z):
        return jnp.where(z >= 0, z, 0.2 * z)

    def lin(x, l):
        y = x @ l["W"].T
        return y if l["b"] is None else y + l["b"]

    def vlin(v, l):
        return jnp.einsum("...ik,oi->...ok", v, l["W"])

    def vroot(v):
        nsq = jnp.sum(v * v, axis=-1, keepdims=True)
        return v * (1.0 + nsq) ** (-0.25)

    h = leaky(lin(x_a, p["a0"]))
    h = leaky(lin(h, p["a1"]))
    y_a = lin(h, p["a2"])

    g = vroot(vlin(x_v, p["v0"]))
    g = vroot(vlin(g, p["v1"]))
    y_v = vlin(g, p["v2"])

    s = p["svp"]
    a_l = x_a @ s["a_l"]["W"].T
    a_r = x_a @ s["a_r"]["W"].T
    v_l = vlin(x_v, s["v_l"])
    v_r = vlin(x_v, s["v_r"])
    aa = a_l * a_r
    vv = jnp.sum(v_l * v_r, axis=-1)
    p_a = aa @ s["aa"]["W"].T + vv @ s["vv"]["W"].T
    p_v = vlin(a_l[..., None] * v_r, s["av"])

    sa = y_a + p_a
    sa_g = sa.reshape(*sa.shape[:-1], ag, adim // ag)
    mean = sa_g.mean(-1, keepdims=True)
    var = ((sa_g - mean) ** 2).mean(-1, keepdims=True)
    z_a = ((sa_g - mean) * jax.lax.rsqrt(var + 1e-5)).reshape(sa.shape)
    z_a = z_a * p["gn_a"]["gamma"] + p["gn_a"]["beta"]

    sv = y_v + p_v
    sv_g = sv.reshape(*sv.shape[:-2], vg, vdim // vg, 3)
    m2 = jnp.mean(jnp.sum(sv_g * sv_g, axis=-1), axis=-1)[..., None, None]
    z_v = (sv_g * jax.lax.rsqrt(m2 + 1e-5)).reshape(sv.shape)
    z_v = z_v * p["gn_v"]["gamma"][:, None]

    return x_a + z_a, x_v + z_v


# ----------------------------------------------------------------------------
# Deterministic parameter initialization (PyTorch-default-style uniform)
# ----------------------------------------------------------------------------
class KeyGen:
    def __init__(self, seed=0):
        self._key = jax.random.PRNGKey(seed)

    def __call__(self):
        self._key, k = jax.random.split(self._key)
        return k


def _unif(kg, shape, fan_in):
    s = 1.0 / math.sqrt(max(fan_in, 1))
    return jax.random.uniform(kg(), shape, jnp.float32, minval=-s, maxval=s)


def init_linear(kg, din, dout, bias=True):
    return {"W": _unif(kg, (dout, din), din),
            "b": _unif(kg, (dout,), din) if bias else None}


def init_veclin(kg, din, dout):
    return {"W": _unif(kg, (dout, din), din)}


def init_svp(kg, adim, vdim, rank):
    return {"a_l": init_linear(kg, adim, rank, bias=False),
            "a_r": init_linear(kg, adim, rank, bias=False),
            "v_l": init_veclin(kg, vdim, rank),
            "v_r": init_veclin(kg, vdim, rank),
            "aa": init_linear(kg, rank, adim, bias=False),
            "vv": init_linear(kg, rank, adim, bias=False),
            "av": init_veclin(kg, rank, vdim)}


def init_local_res(kg, cfg):
    adim, vdim, rank = cfg["adim"], cfg["vdim"], cfg["rank"]
    return {"a0": init_linear(kg, adim, adim),
            "a1": init_linear(kg, adim, adim),
            "a2": init_linear(kg, adim, adim),
            "v0": init_veclin(kg, vdim, vdim),
            "v1": init_veclin(kg, vdim, vdim),
            "v2": init_veclin(kg, vdim, vdim),
            "svp": init_svp(kg, adim, vdim, rank),
            "gn_a": {"gamma": jnp.ones((adim,), jnp.float32),
                     "beta": jnp.zeros((adim,), jnp.float32)},
            "gn_v": {"gamma": jnp.ones((vdim,), jnp.float32)}}


# ----------------------------------------------------------------------------
if __name__ == "__main__":
    cfg = dict(adim=32, vdim=16, rank=8, agroups=4, vgroups=4)
    batch, nodes = 2, 8

    params = init_local_res(KeyGen(0), cfg)

    key = jax.random.PRNGKey(0)
    k1, k2 = jax.random.split(key)
    x_a = jax.random.normal(k1, (batch, nodes, cfg["adim"]), jnp.float32)
    x_v = jax.random.normal(k2, (batch, nodes, cfg["vdim"], 3), jnp.float32)

    ref_a, ref_v = _reference_forward(params, x_a, x_v, cfg)

    # 1) f32 weight pack: validates the exact forward semantics.
    packed_f32 = pack_local_residual_params(params, cfg, dtype=jnp.float32)
    fwd_f32 = jax.jit(functools.partial(local_residual_forward, packed_f32, cfg=cfg))
    out_a, out_v = jax.block_until_ready(fwd_f32(x_a, x_v))
    assert out_a.shape == x_a.shape and out_v.shape == x_v.shape
    assert bool(jnp.all(jnp.isfinite(out_a))) and bool(jnp.all(jnp.isfinite(out_v)))
    err_a = float(jnp.max(jnp.abs(out_a - ref_a)))
    err_v = float(jnp.max(jnp.abs(out_v - ref_v)))
    assert bool(jnp.allclose(out_a, ref_a, atol=1e-2, rtol=1e-2)), err_a
    assert bool(jnp.allclose(out_v, ref_v, atol=1e-2, rtol=1e-2)), err_v

    # 2) bf16 MXU-operand pack (the perf configuration for v6e/v7x); looser
    #    tolerance reflects bf16 operand rounding through the fused matmul chain.
    packed_bf16 = pack_local_residual_params(params, cfg, dtype=jnp.bfloat16)
    fwd_bf16 = jax.jit(functools.partial(local_residual_forward, packed_bf16, cfg=cfg))
    qa, qv = jax.block_until_ready(fwd_bf16(x_a, x_v))
    assert bool(jnp.all(jnp.isfinite(qa))) and bool(jnp.all(jnp.isfinite(qv)))
    err_qa = float(jnp.max(jnp.abs(qa - ref_a)))
    err_qv = float(jnp.max(jnp.abs(qv - ref_v)))
    assert bool(jnp.allclose(qa, ref_a, atol=1e-1, rtol=1e-1)), err_qa
    assert bool(jnp.allclose(qv, ref_v, atol=1e-1, rtol=1e-1)), err_qv

    print("KERNEL_OK")
</pallas_src>

<mosaic_0001>
module attributes {stable_mosaic.version = 11 : i64} {
  func.func @_local_residual_kernel(%arg0: i32, %arg1: memref<8x32xf32, #tpu.memory_space<vmem>>, %arg2: memref<8x48xf32, #tpu.memory_space<vmem>>, %arg3: memref<80x168xf32, #tpu.memory_space<vmem>>, %arg4: memref<80x80xf32, #tpu.memory_space<vmem>>, %arg5: memref<136x80xf32, #tpu.memory_space<vmem>>, %arg6: memref<160x12xf32, #tpu.memory_space<vmem>>, %arg7: memref<12x80xf32, #tpu.memory_space<vmem>>, %arg8: memref<12x80xf32, #tpu.memory_space<vmem>>, %arg9: memref<48x16xf32, #tpu.memory_space<vmem>>, %arg10: memref<16x48xf32, #tpu.memory_space<vmem>>, %arg11: memref<4x80xf32, #tpu.memory_space<vmem>>, %arg12: memref<8x80xf32, #tpu.memory_space<vmem>>) attributes {dimension_semantics = [#tpu.dimension_semantics<parallel>], iteration_bounds = array<i64: 2>, scalar_prefetch = 0 : i64, scratch_operands = 0 : i64, tpu.core_type = #tpu.core_type<tc>, window_params = [{transform_indices = @transform_0, window_bounds = array<i64: 8, 32>}, {transform_indices = @transform_1, window_bounds = array<i64: 8, 48>}, {pipeline_mode = #tpu.pipeline_mode<synchronous>, transform_indices = @transform_2, window_bounds = array<i64: 80, 168>}, {pipeline_mode = #tpu.pipeline_mode<synchronous>, transform_indices = @transform_3, window_bounds = array<i64: 80, 80>}, {pipeline_mode = #tpu.pipeline_mode<synchronous>, transform_indices = @transform_4, window_bounds = array<i64: 136, 80>}, {pipeline_mode = #tpu.pipeline_mode<synchronous>, transform_indices = @transform_5, window_bounds = array<i64: 160, 12>}, {pipeline_mode = #tpu.pipeline_mode<synchronous>, transform_indices = @transform_6, window_bounds = array<i64: 12, 80>}, {pipeline_mode = #tpu.pipeline_mode<synchronous>, transform_indices = @transform_7, window_bounds = array<i64: 12, 80>}, {pipeline_mode = #tpu.pipeline_mode<synchronous>, transform_indices = @transform_8, window_bounds = array<i64: 48, 16>}, {pipeline_mode = #tpu.pipeline_mode<synchronous>, transform_indices = @transform_9, window_bounds = array<i64: 16, 48>}, {pipeline_mode = #tpu.pipeline_mode<synchronous>, transform_indices = @transform_10, window_bounds = array<i64: 4, 80>}, {transform_indices = @transform_11, window_bounds = array<i64: 8, 80>}]} {
    %c0 = arith.constant 0 : index
    %c0_0 = arith.constant 0 : index
    %0 = vector.load %arg1[%c0, %c0_0] : memref<8x32xf32, #tpu.memory_space<vmem>>, vector<8x32xf32>
    %c0_1 = arith.constant 0 : index
    %c0_2 = arith.constant 0 : index
    %1 = vector.load %arg2[%c0_1, %c0_2] : memref<8x48xf32, #tpu.memory_space<vmem>>, vector<8x48xf32>
    %2 = tpu.concatenate %0, %1 in 1 : vector<8x32xf32>, vector<8x48xf32> -> vector<8x80xf32>
    %c0_3 = arith.constant 0 : index
    %c0_4 = arith.constant 0 : index
    %3 = vector.load %arg11[%c0_3, %c0_4] : memref<4x80xf32, #tpu.memory_space<vmem>>, vector<4x80xf32>
    %c0_5 = arith.constant 0 : index
    %c0_6 = arith.constant 0 : index
    %4 = vector.load %arg3[%c0_5, %c0_6] : memref<80x168xf32, #tpu.memory_space<vmem>>, vector<80x168xf32>
    %cst = arith.constant dense<0.000000e+00> : vector<8x168xf32>
    %5 = tpu.matmul %2, %4, %cst {dimension_numbers = #tpu.dot_dimension_numbers<[1], [0], [0], [1], [0, 0, 1, 1], [], []>} : vector<8x80xf32>, vector<80x168xf32>, vector<8x168xf32> -> vector<8x168xf32>
    %6 = vector.extract_strided_slice %5 {offsets = [0, 0], sizes = [8, 32], strides = [1, 1]} : vector<8x168xf32> to vector<8x32xf32>
    %7 = vector.extract_strided_slice %5 {offsets = [0, 32], sizes = [8, 48], strides = [1, 1]} : vector<8x168xf32> to vector<8x48xf32>
    %8 = vector.extract_strided_slice %5 {offsets = [0, 80], sizes = [8, 24], strides = [1, 1]} : vector<8x168xf32> to vector<8x24xf32>
    %9 = vector.extract_strided_slice %5 {offsets = [0, 104], sizes = [8, 24], strides = [1, 1]} : vector<8x168xf32> to vector<8x24xf32>
    %10 = vector.extract_strided_slice %5 {offsets = [0, 128], sizes = [8, 8], strides = [1, 1]} : vector<8x168xf32> to vector<8x8xf32>
    %11 = vector.extract_strided_slice %5 {offsets = [0, 136], sizes = [8, 8], strides = [1, 1]} : vector<8x168xf32> to vector<8x8xf32>
    %12 = vector.extract_strided_slice %5 {offsets = [0, 144], sizes = [8, 24], strides = [1, 1]} : vector<8x168xf32> to vector<8x24xf32>
    %13 = vector.extract_strided_slice %3 {offsets = [0, 0], sizes = [1, 32], strides = [1, 1]} : vector<4x80xf32> to vector<1x32xf32>
    %14 = vector.broadcast %13 : vector<1x32xf32> to vector<8x32xf32>
    %15 = arith.addf %6, %14 : vector<8x32xf32>
    %cst_7 = arith.constant 0.000000e+00 : f32
    %16 = vector.broadcast %cst_7 : f32 to vector<8x32xf32>
    %17 = arith.cmpf oge, %15, %16 : vector<8x32xf32>
    %cst_8 = arith.constant 2.000000e-01 : f32
    %18 = vector.broadcast %cst_8 : f32 to vector<8x32xf32>
    %19 = arith.mulf %18, %15 : vector<8x32xf32>
    %20 = arith.select %17, %15, %19 : vector<8x32xi1>, vector<8x32xf32>
    %21 = arith.mulf %7, %7 : vector<8x48xf32>
    %c0_9 = arith.constant 0 : index
    %c0_10 = arith.constant 0 : index
    %22 = vector.load %arg9[%c0_9, %c0_10] : memref<48x16xf32, #tpu.memory_space<vmem>>, vector<48x16xf32>
    %cst_11 = arith.constant dense<0.000000e+00> : vector<8x16xf32>
    %23 = tpu.matmul %21, %22, %cst_11 {dimension_numbers = #tpu.dot_dimension_numbers<[1], [0], [0], [1], [0, 0, 1, 1], [], []>} : vector<8x48xf32>, vector<48x16xf32>, vector<8x16xf32> -> vector<8x16xf32>
    %cst_12 = arith.constant 1.000000e+00 : f32
    %24 = vector.broadcast %cst_12 : f32 to vector<8x16xf32>
    %25 = arith.addf %24, %23 : vector<8x16xf32>
    %26 = math.sqrt %25 : vector<8x16xf32>
    %27 = math.rsqrt %26 : vector<8x16xf32>
    %c0_13 = arith.constant 0 : index
    %c0_14 = arith.constant 0 : index
    %28 = vector.load %arg10[%c0_13, %c0_14] : memref<16x48xf32, #tpu.memory_space<vmem>>, vector<16x48xf32>
    %cst_15 = arith.constant dense<0.000000e+00> : vector<8x48xf32>
    %29 = tpu.matmul %27, %28, %cst_15 {dimension_numbers = #tpu.dot_dimension_numbers<[1], [0], [0], [1], [0, 0, 1, 1], [], []>} : vector<8x16xf32>, vector<16x48xf32>, vector<8x48xf32> -> vector<8x48xf32>
    %30 = arith.mulf %7, %29 : vector<8x48xf32>
    %31 = tpu.concatenate %20, %30 in 1 : vector<8x32xf32>, vector<8x48xf32> -> vector<8x80xf32>
    %c0_16 = arith.constant 0 : index
    %c0_17 = arith.constant 0 : index
    %32 = vector.load %arg4[%c0_16, %c0_17] : memref<80x80xf32, #tpu.memory_space<vmem>>, vector<80x80xf32>
    %cst_18 = arith.constant dense<0.000000e+00> : vector<8x80xf32>
    %33 = tpu.matmul %31, %32, %cst_18 {dimension_numbers = #tpu.dot_dimension_numbers<[1], [0], [0], [1], [0, 0, 1, 1], [], []>} : vector<8x80xf32>, vector<80x80xf32>, vector<8x80xf32> -> vector<8x80xf32>
    %34 = vector.extract_strided_slice %33 {offsets = [0, 0], sizes = [8, 32], strides = [1, 1]} : vector<8x80xf32> to vector<8x32xf32>
    %35 = vector.extract_strided_slice %3 {offsets = [1, 0], sizes = [1, 32], strides = [1, 1]} : vector<4x80xf32> to vector<1x32xf32>
    %36 = vector.broadcast %35 : vector<1x32xf32> to vector<8x32xf32>
    %37 = arith.addf %34, %36 : vector<8x32xf32>
    %cst_19 = arith.constant 0.000000e+00 : f32
    %38 = vector.broadcast %cst_19 : f32 to vector<8x32xf32>
    %39 = arith.cmpf oge, %37, %38 : vector<8x32xf32>
    %cst_20 = arith.constant 2.000000e-01 : f32
    %40 = vector.broadcast %cst_20 : f32 to vector<8x32xf32>
    %41 = arith.mulf %40, %37 : vector<8x32xf32>
    %42 = arith.select %39, %37, %41 : vector<8x32xi1>, vector<8x32xf32>
    %43 = vector.extract_strided_slice %33 {offsets = [0, 32], sizes = [8, 48], strides = [1, 1]} : vector<8x80xf32> to vector<8x48xf32>
    %44 = arith.mulf %43, %43 : vector<8x48xf32>
    %c0_21 = arith.constant 0 : index
    %c0_22 = arith.constant 0 : index
    %45 = vector.load %arg9[%c0_21, %c0_22] : memref<48x16xf32, #tpu.memory_space<vmem>>, vector<48x16xf32>
    %cst_23 = arith.constant dense<0.000000e+00> : vector<8x16xf32>
    %46 = tpu.matmul %44, %45, %cst_23 {dimension_numbers = #tpu.dot_dimension_numbers<[1], [0], [0], [1], [0, 0, 1, 1], [], []>} : vector<8x48xf32>, vector<48x16xf32>, vector<8x16xf32> -> vector<8x16xf32>
    %cst_24 = arith.constant 1.000000e+00 : f32
    %47 = vector.broadcast %cst_24 : f32 to vector<8x16xf32>
    %48 = arith.addf %47, %46 : vector<8x16xf32>
    %49 = math.sqrt %48 : vector<8x16xf32>
    %50 = math.rsqrt %49 : vector<8x16xf32>
    %c0_25 = arith.constant 0 : index
    %c0_26 = arith.constant 0 : index
    %51 = vector.load %arg10[%c0_25, %c0_26] : memref<16x48xf32, #tpu.memory_space<vmem>>, vector<16x48xf32>
    %cst_27 = arith.constant dense<0.000000e+00> : vector<8x48xf32>
    %52 = tpu.matmul %50, %51, %cst_27 {dimension_numbers = #tpu.dot_dimension_numbers<[1], [0], [0], [1], [0, 0, 1, 1], [], []>} : vector<8x16xf32>, vector<16x48xf32>, vector<8x48xf32> -> vector<8x48xf32>
    %53 = arith.mulf %43, %52 : vector<8x48xf32>
    %54 = arith.mulf %10, %11 : vector<8x8xf32>
    %55 = arith.mulf %8, %9 : vector<8x24xf32>
    %56 = arith.mulf %12, %9 : vector<8x24xf32>
    %57 = tpu.concatenate %42, %53, %54, %55, %56 in 1 : vector<8x32xf32>, vector<8x48xf32>, vector<8x8xf32>, vector<8x24xf32>, vector<8x24xf32> -> vector<8x136xf32>
    %c0_28 = arith.constant 0 : index
    %c0_29 = arith.constant 0 : index
    %58 = vector.load %arg5[%c0_28, %c0_29] : memref<136x80xf32, #tpu.memory_space<vmem>>, vector<136x80xf32>
    %cst_30 = arith.constant dense<0.000000e+00> : vector<8x80xf32>
    %59 = tpu.matmul %57, %58, %cst_30 {dimension_numbers = #tpu.dot_dimension_numbers<[1], [0], [0], [1], [0, 0, 1, 1], [], []>} : vector<8x136xf32>, vector<136x80xf32>, vector<8x80xf32> -> vector<8x80xf32>
    %60 = vector.extract_strided_slice %3 {offsets = [2, 0], sizes = [1, 80], strides = [1, 1]} : vector<4x80xf32> to vector<1x80xf32>
    %61 = vector.broadcast %60 : vector<1x80xf32> to vector<8x80xf32>
    %62 = arith.addf %59, %61 : vector<8x80xf32>
    %63 = arith.mulf %62, %62 : vector<8x80xf32>
    %64 = tpu.concatenate %62, %63 in 1 : vector<8x80xf32>, vector<8x80xf32> -> vector<8x160xf32>
    %c0_31 = arith.constant 0 : index
    %c0_32 = arith.constant 0 : index
    %65 = vector.load %arg6[%c0_31, %c0_32] : memref<160x12xf32, #tpu.memory_space<vmem>>, vector<160x12xf32>
    %cst_33 = arith.constant dense<0.000000e+00> : vector<8x12xf32>
    %66 = tpu.matmul %64, %65, %cst_33 {dimension_numbers = #tpu.dot_dimension_numbers<[1], [0], [0], [1], [0, 0, 1, 1], [], []>} : vector<8x160xf32>, vector<160x12xf32>, vector<8x12xf32> -> vector<8x12xf32>
    %67 = vector.extract_strided_slice %66 {offsets = [0, 0], sizes = [8, 4], strides = [1, 1]} : vector<8x12xf32> to vector<8x4xf32>
    %68 = vector.extract_strided_slice %66 {offsets = [0, 4], sizes = [8, 4], strides = [1, 1]} : vector<8x12xf32> to vector<8x4xf32>
    %69 = arith.mulf %67, %67 : vector<8x4xf32>
    %70 = arith.subf %68, %69 : vector<8x4xf32>
    %cst_34 = arith.constant 0.000000e+00 : f32
    %71 = vector.broadcast %cst_34 : f32 to vector<8x4xf32>
    %72 = arith.maximumf %70, %71 : vector<8x4xf32>
    %cst_35 = arith.constant 9.99999974E-6 : f32
    %73 = vector.broadcast %cst_35 : f32 to vector<8x4xf32>
    %74 = arith.addf %72, %73 : vector<8x4xf32>
    %75 = math.rsqrt %74 : vector<8x4xf32>
    %76 = vector.extract_strided_slice %66 {offsets = [0, 8], sizes = [8, 4], strides = [1, 1]} : vector<8x12xf32> to vector<8x4xf32>
    %cst_36 = arith.constant 9.99999974E-6 : f32
    %77 = vector.broadcast %cst_36 : f32 to vector<8x4xf32>
    %78 = arith.addf %76, %77 : vector<8x4xf32>
    %79 = math.rsqrt %78 : vector<8x4xf32>
    %80 = tpu.concatenate %67, %75, %79 in 1 : vector<8x4xf32>, vector<8x4xf32>, vector<8x4xf32> -> vector<8x12xf32>
    %c0_37 = arith.constant 0 : index
    %c0_38 = arith.constant 0 : index
    %81 = vector.load %arg7[%c0_37, %c0_38] : memref<12x80xf32, #tpu.memory_space<vmem>>, vector<12x80xf32>
    %cst_39 = arith.constant dense<0.000000e+00> : vector<8x80xf32>
    %82 = tpu.matmul %80, %81, %cst_39 {dimension_numbers = #tpu.dot_dimension_numbers<[1], [0], [0], [1], [0, 0, 1, 1], [], []>} : vector<8x12xf32>, vector<12x80xf32>, vector<8x80xf32> -> vector<8x80xf32>
    %c0_40 = arith.constant 0 : index
    %c0_41 = arith.constant 0 : index
    %83 = vector.load %arg8[%c0_40, %c0_41] : memref<12x80xf32, #tpu.memory_space<vmem>>, vector<12x80xf32>
    %cst_42 = arith.constant dense<0.000000e+00> : vector<8x80xf32>
    %84 = tpu.matmul %80, %83, %cst_42 {dimension_numbers = #tpu.dot_dimension_numbers<[1], [0], [0], [1], [0, 0, 1, 1], [], []>} : vector<8x12xf32>, vector<12x80xf32>, vector<8x80xf32> -> vector<8x80xf32>
    %85 = arith.subf %62, %82 : vector<8x80xf32>
    %86 = arith.mulf %85, %84 : vector<8x80xf32>
    %87 = vector.extract_strided_slice %3 {offsets = [3, 0], sizes = [1, 80], strides = [1, 1]} : vector<4x80xf32> to vector<1x80xf32>
    %88 = vector.broadcast %87 : vector<1x80xf32> to vector<8x80xf32>
    %89 = arith.addf %86, %88 : vector<8x80xf32>
    %90 = arith.addf %2, %89 : vector<8x80xf32>
    %c0_43 = arith.constant 0 : index
    %c0_44 = arith.constant 0 : index
    %91 = vector.load %arg12[%c0_43, %c0_44] : memref<8x80xf32, #tpu.memory_space<vmem>>, vector<8x80xf32>
    tpu.vector_store %arg12[%c0_43, %c0_44], %90 {strides = array<i32>} : memref<8x80xf32, #tpu.memory_space<vmem>>, vector<8x80xf32>,
    return
  }
  func.func @transform_0(%arg0: i32) -> (i32, i32) {
    %c0_i32 = arith.constant 0 : i32
    %c0_i32_0 = arith.constant 0 : i32
    return %arg0, %c0_i32 : i32, i32
  }
  func.func @transform_1(%arg0: i32) -> (i32, i32) {
    %c0_i32 = arith.constant 0 : i32
    %c0_i32_0 = arith.constant 0 : i32
    return %arg0, %c0_i32 : i32, i32
  }
  func.func @transform_2(%arg0: i32) -> (i32, i32) {
    %c0_i32 = arith.constant 0 : i32
    %c0_i32_0 = arith.constant 0 : i32
    %c0_i32_1 = arith.constant 0 : i32
    return %c0_i32, %c0_i32_0 : i32, i32
  }
  func.func @transform_3(%arg0: i32) -> (i32, i32) {
    %c0_i32 = arith.constant 0 : i32
    %c0_i32_0 = arith.constant 0 : i32
    %c0_i32_1 = arith.constant 0 : i32
    return %c0_i32, %c0_i32_0 : i32, i32
  }
  func.func @transform_4(%arg0: i32) -> (i32, i32) {
    %c0_i32 = arith.constant 0 : i32
    %c0_i32_0 = arith.constant 0 : i32
    %c0_i32_1 = arith.constant 0 : i32
    return %c0_i32, %c0_i32_0 : i32, i32
  }
  func.func @transform_5(%arg0: i32) -> (i32, i32) {
    %c0_i32 = arith.constant 0 : i32
    %c0_i32_0 = arith.constant 0 : i32
    %c0_i32_1 = arith.constant 0 : i32
    return %c0_i32, %c0_i32_0 : i32, i32
  }
  func.func @transform_6(%arg0: i32) -> (i32, i32) {
    %c0_i32 = arith.constant 0 : i32
    %c0_i32_0 = arith.constant 0 : i32
    %c0_i32_1 = arith.constant 0 : i32
    return %c0_i32, %c0_i32_0 : i32, i32
  }
  func.func @transform_7(%arg0: i32) -> (i32, i32) {
    %c0_i32 = arith.constant 0 : i32
    %c0_i32_0 = arith.constant 0 : i32
    %c0_i32_1 = arith.constant 0 : i32
    return %c0_i32, %c0_i32_0 : i32, i32
  }
  func.func @transform_8(%arg0: i32) -> (i32, i32) {
    %c0_i32 = arith.constant 0 : i32
    %c0_i32_0 = arith.constant 0 : i32
    %c0_i32_1 = arith.constant 0 : i32
    return %c0_i32, %c0_i32_0 : i32, i32
  }
  func.func @transform_9(%arg0: i32) -> (i32, i32) {
    %c0_i32 = arith.constant 0 : i32
    %c0_i32_0 = arith.constant 0 : i32
    %c0_i32_1 = arith.constant 0 : i32
    return %c0_i32, %c0_i32_0 : i32, i32
  }
  func.func @transform_10(%arg0: i32) -> (i32, i32) {
    %c0_i32 = arith.constant 0 : i32
    %c0_i32_0 = arith.constant 0 : i32
    %c0_i32_1 = arith.constant 0 : i32
    return %c0_i32, %c0_i32_0 : i32, i32
  }
  func.func @transform_11(%arg0: i32) -> (i32, i32) {
    %c0_i32 = arith.constant 0 : i32
    %c0_i32_0 = arith.constant 0 : i32
    return %arg0, %c0_i32 : i32, i32
  }
}

</mosaic_0001>

<llo_original>
// kernel: local_residual_forward.1
$region0: #{local_residual_forward.1}
  #allocation0 [shape = 'u32[]', space=smem, size = 0x4, offset = 0x4, fixed_abs, tag = 'smem constant byte address 0x4 - core index']
  #allocation1 [shape = 'u32[144,128]{1,0:T(1,128)}', space=vmem, size = 0x12000, scoped, tag = 'internal scratch']
  %s0 = inlined_call_operand.hbm [shape: f32[16,32], index: 0, kind: input, shape index: {}]
  %s1 = inlined_call_operand.vmem [shape: f32[16,48], index: 1, kind: input, shape index: {}]
  %s2 = inlined_call_operand.vmem [shape: f32[80,168], index: 2, kind: input, shape index: {}]
  %s3 = inlined_call_operand.hbm [shape: f32[80,80], index: 3, kind: input, shape index: {}]
  %s4 = inlined_call_operand.hbm [shape: f32[136,80], index: 4, kind: input, shape index: {}]
  %s5 = inlined_call_operand.vmem [shape: f32[160,12], index: 5, kind: input, shape index: {}]
  %s6 = inlined_call_operand.hbm [shape: f32[12,80], index: 6, kind: input, shape index: {}]
  %s7 = inlined_call_operand.hbm [shape: f32[12,80], index: 7, kind: input, shape index: {}]
  %s8 = inlined_call_operand.vmem [shape: f32[48,16], index: 8, kind: input, shape index: {}]
  %s9 = inlined_call_operand.vmem [shape: f32[16,48], index: 9, kind: input, shape index: {}]
  %s10 = inlined_call_operand.vmem [shape: f32[4,80], index: 10, kind: input, shape index: {}]
  %s11 = inlined_call_operand.vmem [shape: f32[16,80], index: 11, kind: output, shape index: {}]
  %s12 = sld [smem:[#allocation0]]
  $region97: #{local_residual_forward.1} parent=0
    _
  %s14 = ssub.s32 1, %s12
  %s15 = scalar_select 0, %s14, %s12
  $region1: #{local_residual_forward.1} parent=0
    #allocation2 [shape = 'u8[8192]{0}', space=vmem, size = 0x2000, scoped, tag = 'input window, operand 0']
    #allocation3 [shape = 's32[2]{0}', space=sflag, size = 0x8, scoped, tag = 'scoped memory for local_residual_forward.1']
    #allocation4 [shape = 'u8[40960]{0}', space=vmem, size = 0xa000, scoped, tag = 'input window, operand 3, single buffered']
    #allocation5 [shape = 's32[1]{0}', space=sflag, size = 0x4, scoped, tag = 'scoped memory for local_residual_forward.1']
    #allocation6 [shape = 'u8[69632]{0}', space=vmem, size = 0x11000, scoped, tag = 'input window, operand 4, single buffered']
    #allocation7 [shape = 'u8[8192]{0}', space=vmem, size = 0x2000, scoped, tag = 'input window, operand 6, single buffered']
    #allocation8 [shape = 's32[1]{0}', space=sflag, size = 0x4, scoped, tag = 'scoped memory for local_residual_forward.1']
    #allocation9 [shape = 'u8[8192]{0}', space=vmem, size = 0x2000, scoped, tag = 'input window, operand 7, single buffered']
    %16 = vsyncpa [#allocation3], 0
    %s17 = scalar_lea.sflag [#allocation3], 1
    %18 = vsyncpa %s17, 0
    %19 = vsyncpa [#allocation5], 0
    %20 = vsyncpa [#allocation8], 0
    loop: start=0, step=1, limit=4
    $region2: #{local_residual_forward.1} parent=1 // loop_pre_header
      _
    $region3: #{local_residual_forward.1} parent=1 // loop_header
      %s22 = sphi 0, %s26
      %p23 = scmp.ge.s32.totalorder %s22, 4
      %s32 = sphi 0, %s34
      %s35 = sphi 0, %s32
      %s36 = sphi 0, %s35
      %s52 = sphi 0, %s36
      %s58 = sphi 0, %s60
      %s61 = sphi 0, %s58
      %s62 = sphi 0, %s61
      %s78 = sphi 0, %s62
      %s82 = sphi 0, %s82
      %s84 = sphi 0, %s82
      %s85 = sphi 0, %s84
      %s99 = sphi 0, %s85
      %s103 = sphi 0, %s103
      %s105 = sphi 0, %s103
      %s106 = sphi 0, %s105
      %s120 = sphi 0, %s106
      %s124 = sphi 0, %s124
      %s126 = sphi 0, %s124
      %s127 = sphi 0, %s126
      %s141 = sphi 0, %s127
      %s145 = sphi 0, %s145
      %s147 = sphi 0, %s145
      %s148 = sphi 0, %s147
      %s162 = sphi 0, %s148
      %s166 = sphi 0, %s166
      %s168 = sphi 0, %s166
      %s169 = sphi 0, %s168
      %s183 = sphi 0, %s169
      %s187 = sphi 0, %s187
      %s189 = sphi 0, %s187
      %s190 = sphi 0, %s189
      %s204 = sphi 0, %s190
      %s208 = sphi 0, %s208
      %s210 = sphi 0, %s208
      %s211 = sphi 0, %s210
      %s225 = sphi 0, %s211
      %s229 = sphi 0, %s229
      %s231 = sphi 0, %s229
      %s232 = sphi 0, %s231
      %s246 = sphi 0, %s232
      %s250 = sphi 0, %s250
      %s252 = sphi 0, %s250
      %s253 = sphi 0, %s252
      %s267 = sphi 0, %s253
      %s273 = sphi 0, %s275
      %s276 = sphi 0, %s273
      %s277 = sphi 0, %s276
      %s293 = sphi 0, %s277
    $region4: #{local_residual_forward.1} parent=1 // loop_header_branch
      %25 = sbr.rel (%p23) target = $region8
    $region5: #{local_residual_forward.1} parent=1 // loop_body
      %s27 = ssub.s32 %s22, 1
      %s28 = ssub.s32 %s22, 2
      %s29 = sadd.s32 %s22, 1
      %s30 = ssub.s32 %s22, %s29
      %p31 = scmp.eq.s32.totalorder %s30, 0
      %s33 = sadd.s32 %s32, 1
      %s34 = scalar_select %p31, %s32, %s33
      %p37 = pneg %p31
      %p38 = scmp.eq.s32.totalorder %s22, 1
      %p39 = por %p37, %p38
      %p40 = scmp.ne.s32.totalorder %s32, %s35
      %p41 = scmp.eq.s32.totalorder %s22, 0
      %p42 = por %p40, %p41
      %p43 = scmp.ne.s32.totalorder %s32, %s35
      %p44 = scmp.eq.s32.totalorder %s27, 1
      %p45 = por %p43, %p44
      %p46 = scmp.ne.s32.totalorder %s35, %s36
      %p47 = scmp.eq.s32.totalorder %s27, 0
      %p48 = por %p46, %p47
      %p49 = scmp.ne.s32.totalorder %s35, %s36
      %p50 = scmp.eq.s32.totalorder %s28, 1
      %p51 = por %p49, %p50
      %p53 = scmp.ne.s32.totalorder %s36, %s52
      %p54 = scmp.eq.s32.totalorder %s28, 0
      %p55 = por %p53, %p54
      %s56 = ssub.s32 %s22, %s29
      %p57 = scmp.eq.s32.totalorder %s56, 0
      %s59 = sadd.s32 %s58, 1
      %s60 = scalar_select %p57, %s58, %s59
      %p63 = pneg %p57
      %p64 = scmp.eq.s32.totalorder %s22, 1
      %p65 = por %p63, %p64
      %p66 = scmp.ne.s32.totalorder %s58, %s61
      %p67 = scmp.eq.s32.totalorder %s22, 0
      %p68 = por %p66, %p67
      %p69 = scmp.ne.s32.totalorder %s58, %s61
      %p70 = scmp.eq.s32.totalorder %s27, 1
      %p71 = por %p69, %p70
      %p72 = scmp.ne.s32.totalorder %s61, %s62
      %p73 = scmp.eq.s32.totalorder %s27, 0
      %p74 = por %p72, %p73
      %p75 = scmp.ne.s32.totalorder %s61, %s62
      %p76 = scmp.eq.s32.totalorder %s28, 1
      %p77 = por %p75, %p76
      %p79 = scmp.ne.s32.totalorder %s62, %s78
      %p80 = scmp.eq.s32.totalorder %s28, 0
      %p81 = por %p79, %p80
      %s83 = sadd.s32 %s82, 1
      %p86 = scmp.eq.s32.totalorder %s22, 1
      %p87 = scmp.ne.s32.totalorder %s82, %s84
      %p88 = scmp.eq.s32.totalorder %s22, 0
      %p89 = por %p87, %p88
      %p90 = scmp.ne.s32.totalorder %s82, %s84
      %p91 = scmp.eq.s32.totalorder %s27, 1
      %p92 = por %p90, %p91
      %p93 = scmp.ne.s32.totalorder %s84, %s85
      %p94 = scmp.eq.s32.totalorder %s27, 0
      %p95 = por %p93, %p94
      %p96 = scmp.ne.s32.totalorder %s84, %s85
      %p97 = scmp.eq.s32.totalorder %s28, 1
      %p98 = por %p96, %p97
      %p100 = scmp.ne.s32.totalorder %s85, %s99
      %p101 = scmp.eq.s32.totalorder %s28, 0
      %p102 = por %p100, %p101
      %s104 = sadd.s32 %s103, 1
      %p107 = scmp.eq.s32.totalorder %s22, 1
      %p108 = scmp.ne.s32.totalorder %s103, %s105
      %p109 = scmp.eq.s32.totalorder %s22, 0
      %p110 = por %p108, %p109
      %p111 = scmp.ne.s32.totalorder %s103, %s105
      %p112 = scmp.eq.s32.totalorder %s27, 1
      %p113 = por %p111, %p112
      %p114 = scmp.ne.s32.totalorder %s105, %s106
      %p115 = scmp.eq.s32.totalorder %s27, 0
      %p116 = por %p114, %p115
      %p117 = scmp.ne.s32.totalorder %s105, %s106
      %p118 = scmp.eq.s32.totalorder %s28, 1
      %p119 = por %p117, %p118
      %p121 = scmp.ne.s32.totalorder %s106, %s120
      %p122 = scmp.eq.s32.totalorder %s28, 0
      %p123 = por %p121, %p122
      %s125 = sadd.s32 %s124, 1
      %p128 = scmp.eq.s32.totalorder %s22, 1
      %p129 = scmp.ne.s32.totalorder %s124, %s126
      %p130 = scmp.eq.s32.totalorder %s22, 0
      %p131 = por %p129, %p130
      %p132 = scmp.ne.s32.totalorder %s124, %s126
      %p133 = scmp.eq.s32.totalorder %s27, 1
      %p134 = por %p132, %p133
      %p135 = scmp.ne.s32.totalorder %s126, %s127
      %p136 = scmp.eq.s32.totalorder %s27, 0
      %p137 = por %p135, %p136
      %p138 = scmp.ne.s32.totalorder %s126, %s127
      %p139 = scmp.eq.s32.totalorder %s28, 1
      %p140 = por %p138, %p139
      %p142 = scmp.ne.s32.totalorder %s127, %s141
      %p143 = scmp.eq.s32.totalorder %s28, 0
      %p144 = por %p142, %p143
      %s146 = sadd.s32 %s145, 1
      %p149 = scmp.eq.s32.totalorder %s22, 1
      %p150 = scmp.ne.s32.totalorder %s145, %s147
      %p151 = scmp.eq.s32.totalorder %s22, 0
      %p152 = por %p150, %p151
      %p153 = scmp.ne.s32.totalorder %s145, %s147
      %p154 = scmp.eq.s32.totalorder %s27, 1
      %p155 = por %p153, %p154
      %p156 = scmp.ne.s32.totalorder %s147, %s148
      %p157 = scmp.eq.s32.totalorder %s27, 0
      %p158 = por %p156, %p157
      %p159 = scmp.ne.s32.totalorder %s147, %s148
      %p160 = scmp.eq.s32.totalorder %s28, 1
      %p161 = por %p159, %p160
      %p163 = scmp.ne.s32.totalorder %s148, %s162
      %p164 = scmp.eq.s32.totalorder %s28, 0
      %p165 = por %p163, %p164
      %s167 = sadd.s32 %s166, 1
      %p170 = scmp.eq.s32.totalorder %s22, 1
      %p171 = scmp.ne.s32.totalorder %s166, %s168
      %p172 = scmp.eq.s32.totalorder %s22, 0
      %p173 = por %p171, %p172
      %p174 = scmp.ne.s32.totalorder %s166, %s168
      %p175 = scmp.eq.s32.totalorder %s27, 1
      %p176 = por %p174, %p175
      %p177 = scmp.ne.s32.totalorder %s168, %s169
      %p178 = scmp.eq.s32.totalorder %s27, 0
      %p179 = por %p177, %p178
      %p180 = scmp.ne.s32.totalorder %s168, %s169
      %p181 = scmp.eq.s32.totalorder %s28, 1
      %p182 = por %p180, %p181
      %p184 = scmp.ne.s32.totalorder %s169, %s183
      %p185 = scmp.eq.s32.totalorder %s28, 0
      %p186 = por %p184, %p185
      %s188 = sadd.s32 %s187, 1
      %p191 = scmp.eq.s32.totalorder %s22, 1
      %p192 = scmp.ne.s32.totalorder %s187, %s189
      %p193 = scmp.eq.s32.totalorder %s22, 0
      %p194 = por %p192, %p193
      %p195 = scmp.ne.s32.totalorder %s187, %s189
      %p196 = scmp.eq.s32.totalorder %s27, 1
      %p197 = por %p195, %p196
      %p198 = scmp.ne.s32.totalorder %s189, %s190
      %p199 = scmp.eq.s32.totalorder %s27, 0
      %p200 = por %p198, %p199
      %p201 = scmp.ne.s32.totalorder %s189, %s190
      %p202 = scmp.eq.s32.totalorder %s28, 1
      %p203 = por %p201, %p202
      %p205 = scmp.ne.s32.totalorder %s190, %s204
      %p206 = scmp.eq.s32.totalorder %s28, 0
      %p207 = por %p205, %p206
      %s209 = sadd.s32 %s208, 1
      %p212 = scmp.eq.s32.totalorder %s22, 1
      %p213 = scmp.ne.s32.totalorder %s208, %s210
      %p214 = scmp.eq.s32.totalorder %s22, 0
      %p215 = por %p213, %p214
      %p216 = scmp.ne.s32.totalorder %s208, %s210
      %p217 = scmp.eq.s32.totalorder %s27, 1
      %p218 = por %p216, %p217
      %p219 = scmp.ne.s32.totalorder %s210, %s211
      %p220 = scmp.eq.s32.totalorder %s27, 0
      %p221 = por %p219, %p220
      %p222 = scmp.ne.s32.totalorder %s210, %s211
      %p223 = scmp.eq.s32.totalorder %s28, 1
      %p224 = por %p222, %p223
      %p226 = scmp.ne.s32.totalorder %s211, %s225
      %p227 = scmp.eq.s32.totalorder %s28, 0
      %p228 = por %p226, %p227
      %s230 = sadd.s32 %s229, 1
      %p233 = scmp.eq.s32.totalorder %s22, 1
      %p234 = scmp.ne.s32.totalorder %s229, %s231
      %p235 = scmp.eq.s32.totalorder %s22, 0
      %p236 = por %p234, %p235
      %p237 = scmp.ne.s32.totalorder %s229, %s231
      %p238 = scmp.eq.s32.totalorder %s27, 1
      %p239 = por %p237, %p238
      %p240 = scmp.ne.s32.totalorder %s231, %s232
      %p241 = scmp.eq.s32.totalorder %s27, 0
      %p242 = por %p240, %p241
      %p243 = scmp.ne.s32.totalorder %s231, %s232
      %p244 = scmp.eq.s32.totalorder %s28, 1
      %p245 = por %p243, %p244
      %p247 = scmp.ne.s32.totalorder %s232, %s246
      %p248 = scmp.eq.s32.totalorder %s28, 0
      %p249 = por %p247, %p248
      %s251 = sadd.s32 %s250, 1
      %p254 = scmp.eq.s32.totalorder %s22, 1
      %p255 = scmp.ne.s32.totalorder %s250, %s252
      %p256 = scmp.eq.s32.totalorder %s22, 0
      %p257 = por %p255, %p256
      %p258 = scmp.ne.s32.totalorder %s250, %s252
      %p259 = scmp.eq.s32.totalorder %s27, 1
      %p260 = por %p258, %p259
      %p261 = scmp.ne.s32.totalorder %s252, %s253
      %p262 = scmp.eq.s32.totalorder %s27, 0
      %p263 = por %p261, %p262
      %p264 = scmp.ne.s32.totalorder %s252, %s253
      %p265 = scmp.eq.s32.totalorder %s28, 1
      %p266 = por %p264, %p265
      %p268 = scmp.ne.s32.totalorder %s253, %s267
      %p269 = scmp.eq.s32.totalorder %s28, 0
      %p270 = por %p268, %p269
      %s271 = ssub.s32 %s22, %s29
      %p272 = scmp.eq.s32.totalorder %s271, 0
      %s274 = sadd.s32 %s273, 1
      %s275 = scalar_select %p272, %s273, %s274
      %p278 = pneg %p272
      %p279 = scmp.eq.s32.totalorder %s22, 1
      %p280 = por %p278, %p279
      %p281 = scmp.ne.s32.totalorder %s273, %s276
      %p282 = scmp.eq.s32.totalorder %s22, 0
      %p283 = por %p281, %p282
      %p284 = scmp.ne.s32.totalorder %s273, %s276
      %p285 = scmp.eq.s32.totalorder %s27, 1
      %p286 = por %p284, %p285
      %p287 = scmp.ne.s32.totalorder %s276, %s277
      %p288 = scmp.eq.s32.totalorder %s27, 0
      %p289 = por %p287, %p288
      %p290 = scmp.ne.s32.totalorder %s276, %s277
      %p291 = scmp.eq.s32.totalorder %s28, 1
      %p292 = por %p290, %p291
      %p294 = scmp.ne.s32.totalorder %s277, %s293
      %p295 = scmp.eq.s32.totalorder %s28, 0
      %p296 = por %p294, %p295
      %p297 = scmp.le.s32.totalorder 1, %s22
      %p298 = scmp.lt.s32.totalorder %s22, 3
      %p299 = pnand %p297, %p298
      %p300 = pneg %p299
      // Predicated region
      $region9: #{local_residual_forward.1} parent=5 // pred_check
        _
      $region10: #{local_residual_forward.1} parent=5 // pred_check_branch
        %302 = sbr.rel (%p299) target = $region12
      $region11: #{local_residual_forward.1} parent=5 // pred_region
        %s303 = ssub.s32 %s22, 1
        // Predicated region
        $region13: #{local_residual_forward.1} parent=11 // pred_check
          %p304 = pneg %p95
        $region14: #{local_residual_forward.1} parent=11 // pred_check_branch
          %306 = sbr.rel (%p304) target = $region16
        $region15: #{local_residual_forward.1} parent=11 // pred_region
          _
        $region16: #{local_residual_forward.1} parent=11 // pred_fallthru
          _
        // Predicated region
        $region17: #{local_residual_forward.1} parent=11 // pred_check
          %p307 = pneg %p116
        $region18: #{local_residual_forward.1} parent=11 // pred_check_branch
          %309 = sbr.rel (%p307) target = $region20
        $region19: #{local_residual_forward.1} parent=11 // pred_region
          %s311 = ssub.s32 1280, 1280
          %312 = vsyncadd [#allocation5], %s311
          %s313 = sshll.u32 [#allocation4], 4
          %s314 = int_to_ptr.vmem [resolvable:$true] %s313
          %319 = dma.hbm_to_vmem [thread:$0]  %s3, 1280, %s314, [#allocation5], 128, 128, 8
        $region20: #{local_residual_forward.1} parent=11 // pred_fallthru
          _
        // Predicated region
        $region21: #{local_residual_forward.1} parent=11 // pred_check
          %p320 = pneg %p137
        $region22: #{local_residual_forward.1} parent=11 // pred_check_branch
          %322 = sbr.rel (%p320) target = $region24
        $region23: #{local_residual_forward.1} parent=11 // pred_region
          %s324 = ssub.s32 2176, 2176
          %325 = vsyncadd [#allocation5], %s324
          %s326 = sshll.u32 [#allocation6], 4
          %s327 = int_to_ptr.vmem [resolvable:$true] %s326
          %332 = dma.hbm_to_vmem [thread:$0]  %s4, 2176, %s327, [#allocation5], 128, 128, 8
        $region24: #{local_residual_forward.1} parent=11 // pred_fallthru
          _
        // Predicated region
        $region25: #{local_residual_forward.1} parent=11 // pred_check
          %p333 = pneg %p158
        $region26: #{local_residual_forward.1} parent=11 // pred_check_branch
          %335 = sbr.rel (%p333) target = $region28
        $region27: #{local_residual_forward.1} parent=11 // pred_region
          _
        $region28: #{local_residual_forward.1} parent=11 // pred_fallthru
          _
        // Predicated region
        $region29: #{local_residual_forward.1} parent=11 // pred_check
          %p336 = pneg %p179
        $region30: #{local_residual_forward.1} parent=11 // pred_check_branch
          %338 = sbr.rel (%p336) target = $region32
        $region31: #{local_residual_forward.1} parent=11 // pred_region
          %s340 = ssub.s32 256, 256
          %341 = vsyncadd [#allocation8], %s340
          %s342 = sshll.u32 [#allocation7], 4
          %s343 = int_to_ptr.vmem [resolvable:$true] %s342
          %348 = dma.hbm_to_vmem [thread:$0]  %s6, 256, %s343, [#allocation8], 128, 128, 8
        $region32: #{local_residual_forward.1} parent=11 // pred_fallthru
          _
        // Predicated region
        $region33: #{local_residual_forward.1} parent=11 // pred_check
          %p349 = pneg %p200
        $region34: #{local_residual_forward.1} parent=11 // pred_check_branch
          %351 = sbr.rel (%p349) target = $region36
        $region35: #{local_residual_forward.1} parent=11 // pred_region
          %s353 = ssub.s32 256, 256
          %354 = vsyncadd [#allocation8], %s353
          %s355 = sshll.u32 [#allocation9], 4
          %s356 = int_to_ptr.vmem [resolvable:$true] %s355
          %361 = dma.hbm_to_vmem [thread:$0]  %s7, 256, %s356, [#allocation8], 128, 128, 8
        $region36: #{local_residual_forward.1} parent=11 // pred_fallthru
          _
        // Predicated region
        $region37: #{local_residual_forward.1} parent=11 // pred_check
          %p362 = pneg %p221
        $region38: #{local_residual_forward.1} parent=11 // pred_check_branch
          %364 = sbr.rel (%p362) target = $region40
        $region39: #{local_residual_forward.1} parent=11 // pred_region
          _
        $region40: #{local_residual_forward.1} parent=11 // pred_fallthru
          _
        // Predicated region
        $region41: #{local_residual_forward.1} parent=11 // pred_check
          %p365 = pneg %p242
        $region42: #{local_residual_forward.1} parent=11 // pred_check_branch
          %367 = sbr.rel (%p365) target = $region44
        $region43: #{local_residual_forward.1} parent=11 // pred_region
          _
        $region44: #{local_residual_forward.1} parent=11 // pred_fallthru
          _
        // Predicated region
        $region45: #{local_residual_forward.1} parent=11 // pred_check
          %p368 = pneg %p263
        $region46: #{local_residual_forward.1} parent=11 // pred_check_branch
          %370 = sbr.rel (%p368) target = $region48
        $region47: #{local_residual_forward.1} parent=11 // pred_region
          _
        $region48: #{local_residual_forward.1} parent=11 // pred_fallthru
          _
      $region12: #{local_residual_forward.1} parent=5 // pred_fallthru
        _
      %p371 = scmp.lt.s32.totalorder %s22, 2
      // Predicated region
      $region49: #{local_residual_forward.1} parent=5 // pred_check
        %p372 = pneg %p371
      $region50: #{local_residual_forward.1} parent=5 // pred_check_branch
        %374 = sbr.rel (%p372) target = $region52
      $region51: #{local_residual_forward.1} parent=5 // pred_region
        // Predicated region
        $region53: #{local_residual_forward.1} parent=51 // pred_check
          %p375 = pneg %p42
        $region54: #{local_residual_forward.1} parent=51 // pred_check_branch
          %377 = sbr.rel (%p375) target = $region56
        $region55: #{local_residual_forward.1} parent=51 // pred_region
          %s378 = sand.u32 %s32, 1
          %s379 = scalar_lea.sflag [#allocation3], %s378
          %s380 = sand.u32 %s32, 1
          %s381 = smul.addr %s380, 8
          %s382 = scalar_lea.vmem [#allocation2], %s381
          %s384 = ssub.s32 128, 128
          %385 = vsyncadd %s379, %s384
          %s386 = smul.addr %s22, 128
          %s387 = scalar_lea.hbm %s0, %s386
          %s389 = sshll.u32 %s382, 4
          %s390 = int_to_ptr.vmem [resolvable:$true] %s389
          %392 = dma.hbm_to_vmem [thread:$0]  %s387, 128, %s390, %s379
        $region56: #{local_residual_forward.1} parent=51 // pred_fallthru
          _
        // Predicated region
        $region57: #{local_residual_forward.1} parent=51 // pred_check
          %p393 = pneg %p68
        $region58: #{local_residual_forward.1} parent=51 // pred_check_branch
          %395 = sbr.rel (%p393) target = $region60
        $region59: #{local_residual_forward.1} parent=51 // pred_region
          %p396 = scmp.lt.s32.totalorder %s22, 1
          %s397 = scalar_select %p396, %s22, 1
          %s398 = smul.addr %s397, 8
          %s399 = scalar_lea.vmem %s1, %s398
        $region60: #{local_residual_forward.1} parent=51 // pred_fallthru
          _
      $region52: #{local_residual_forward.1} parent=5 // pred_fallthru
        _
      %p400 = scmp.le.s32.totalorder 1, %s22
      %p401 = scmp.lt.s32.totalorder %s22, 3
      %p402 = pnand %p400, %p401
      %p403 = pneg %p402
      // Predicated region
      $region61: #{local_residual_forward.1} parent=5 // pred_check
        _
      $region62: #{local_residual_forward.1} parent=5 // pred_check_branch
        %405 = sbr.rel (%p402) target = $region64
      $region63: #{local_residual_forward.1} parent=5 // pred_region
        %s406 = ssub.s32 %s22, 1
        %s407 = sand.u32 %s35, 1
        %s408 = scalar_lea.sflag [#allocation3], %s407
        %s409 = sand.u32 %s35, 1
        %s410 = smul.addr %s409, 8
        %s411 = scalar_lea.vmem [#allocation2], %s410
        // Predicated region
        $region65: #{local_residual_forward.1} parent=63 // pred_check
          %p412 = pneg %p48
        $region66: #{local_residual_forward.1} parent=63 // pred_check_branch
          %414 = sbr.rel (%p412) target = $region68
        $region67: #{local_residual_forward.1} parent=63 // pred_region
          %415 = dma.done %s408, 128
        $region68: #{local_residual_forward.1} parent=63 // pred_fallthru
          _
        // Predicated region
        $region69: #{local_residual_forward.1} parent=63 // pred_check
          %p416 = pneg %p116
        $region70: #{local_residual_forward.1} parent=63 // pred_check_branch
          %418 = sbr.rel (%p416) target = $region72
        $region71: #{local_residual_forward.1} parent=63 // pred_region
          %419 = dma.done [#allocation5], 1280
        $region72: #{local_residual_forward.1} parent=63 // pred_fallthru
          _
        // Predicated region
        $region73: #{local_residual_forward.1} parent=63 // pred_check
          %p420 = pneg %p137
        $region74: #{local_residual_forward.1} parent=63 // pred_check_branch
          %422 = sbr.rel (%p420) target = $region76
        $region75: #{local_residual_forward.1} parent=63 // pred_region
          %423 = dma.done [#allocation5], 2176
        $region76: #{local_residual_forward.1} parent=63 // pred_fallthru
          _
        // Predicated region
        $region77: #{local_residual_forward.1} parent=63 // pred_check
          %p424 = pneg %p179
        $region78: #{local_residual_forward.1} parent=63 // pred_check_branch
          %426 = sbr.rel (%p424) target = $region80
        $region79: #{local_residual_forward.1} parent=63 // pred_region
          %427 = dma.done [#allocation8], 256
        $region80: #{local_residual_forward.1} parent=63 // pred_fallthru
          _
        // Predicated region
        $region81: #{local_residual_forward.1} parent=63 // pred_check
          %p428 = pneg %p200
        $region82: #{local_residual_forward.1} parent=63 // pred_check_branch
          %430 = sbr.rel (%p428) target = $region84
        $region83: #{local_residual_forward.1} parent=63 // pred_region
          %431 = dma.done [#allocation8], 256
        $region84: #{local_residual_forward.1} parent=63 // pred_fallthru
          _
        %s432 = sand.u32 %s35, 1
        %s433 = scalar_lea.sflag [#allocation3], %s432
        %s434 = sand.u32 %s35, 1
        %s435 = smul.addr %s434, 8
        %s436 = scalar_lea.vmem [#allocation2], %s435
        %p437 = pneg %p48
        %p438 = pneg %p45
        %p439 = scmp.lt.s32.totalorder %s27, 1
        %s440 = scalar_select %p439, %s27, 1
        %s441 = smul.addr %s440, 8
        %s442 = scalar_lea.vmem %s1, %s441
        %p443 = pneg %p74
        %p444 = pneg %p71
        %p445 = pneg %p95
        %p446 = pneg %p92
        %p447 = pneg %p116
        %p448 = pneg %p113
        %p449 = pneg %p137
        %p450 = pneg %p134
        %p451 = pneg %p158
        %p452 = pneg %p155
        %p453 = pneg %p179
        %p454 = pneg %p176
        %p455 = pneg %p200
        %p456 = pneg %p197
        %p457 = pneg %p221
        %p458 = pneg %p218
        %p459 = pneg %p242
        %p460 = pneg %p239
        %p461 = pneg %p263
        %p462 = pneg %p260
        %p463 = pneg %p289
        %p464 = pneg %p286
        %p465 = scmp.lt.s32.totalorder %s27, 1
        %s466 = scalar_select %p465, %s27, 1
        %s467 = smul.addr %s466, 8
        %s468 = scalar_lea.vmem %s11, %s467
        %p469 = scmp.lt.s32.totalorder %s27, 1
        %s470 = scalar_select %p469, %s27, 1
        %s471 = smul.addr %s470, 8
        %s472 = scalar_lea.vmem %s1, %s471
        %p473 = scmp.lt.s32.totalorder %s27, 1
        %s474 = scalar_select %p473, %s27, 1
        %s475 = smul.addr %s474, 8
        %s476 = scalar_lea.vmem %s11, %s475
        %v477 = vld [vmem:[%s411] sm:$0xff]
        %v478 = vld [vmem:[%s472] sm:$0xff]
        %480 = vrot.lane.b32.xlu0 %v478, 32
        %v481 = vpop.permute.xlu0 %480
        %vm483 = vcmask 261120
        %v484 = vsel %vm483, %v477, %v481
        %v485 = vld [vmem:[%s10] sm:$0xf]
        %v486 = vld [vmem:[%s2] sm:$0xff]
        %v487 = vld [vmem:[%s2 + $0x8] sm:$0xff]
        %v488 = vld [vmem:[%s2 + $0x10] sm:$0xff]
        %v489 = vld [vmem:[%s2 + $0x18] sm:$0xff]
        %v490 = vld [vmem:[%s2 + $0x20] sm:$0xff]
        %v491 = vld [vmem:[%s2 + $0x28] sm:$0xff]
        %v492 = vld [vmem:[%s2 + $0x30] sm:$0xff]
        %v493 = vld [vmem:[%s2 + $0x38] sm:$0xff]
        %v494 = vld [vmem:[%s2 + $0x40] sm:$0xff]
        %v495 = vld [vmem:[%s2 + $0x48] sm:$0xff]
        %v496 = vld [vmem:[%s2 + $0x50] sm:$0xff]
        %v497 = vld [vmem:[%s2 + $0x58] sm:$0xff]
        %v498 = vld [vmem:[%s2 + $0x60] sm:$0xff]
        %v499 = vld [vmem:[%s2 + $0x68] sm:$0xff]
        %v500 = vld [vmem:[%s2 + $0x70] sm:$0xff]
        %v501 = vld [vmem:[%s2 + $0x78] sm:$0xff]
        %v502 = vld [vmem:[%s2 + $0x80] sm:$0xff]
        %v503 = vld [vmem:[%s2 + $0x88] sm:$0xff]
        %v504 = vld [vmem:[%s2 + $0x90] sm:$0xff]
        %v505 = vld [vmem:[%s2 + $0x98] sm:$0xff]
        %vm506 = vcmask 654336
        %v508 = vsel %vm506, %v484, 0
        %510 = vmatprep.subr.mxu0 %v487
        %511 = vmatpush1.msra.mxu0 %v486
        %512 = vmatprep.subr.mxu0 %v489
        %513 = vmatpush1.msra.mxu0 %v488
        %514 = vmatprep.subr.mxu0 %v491
        %515 = vmatpush1.msra.mxu0 %v490
        %516 = vmatprep.subr.mxu0 %v493
        %517 = vmatpush1.msra.mxu0 %v492
        %518 = vmatprep.subr.mxu0 %v495
        %519 = vmatpush1.msra.mxu0 %v494
        %520 = vmatprep.subr.mxu0 %v497
        %521 = vmatpush1.msra.mxu0 %v496
        %522 = vmatprep.subr.mxu0 %v499
        %523 = vmatpush1.msra.mxu0 %v498
        %524 = vmatprep.subr.mxu0 %v501
        %525 = vmatpush1.msra.mxu0 %v500
        %526 = vmatprep.subr.mxu0 %v503
        %527 = vmatpush1.msra.mxu0 %v502
        %528 = vmatprep.subr.mxu0 %v505
        %529 = vmatpush1.msra.mxu0 %v504
        %530 = vmatprep.subr.mxu0 0.0
        %531 = vmatpush1.msra.mxu0 0.0
        %532 = vmatprep.subr.mxu0 0.0
        %533 = vmatpush1.msra.mxu0 0.0
        %534 = vmatprep.subr.mxu0 0.0
        %535 = vmatpush1.msra.mxu0 0.0
        %536 = vmatprep.subr.mxu0 0.0
        %537 = vmatpush1.msra.mxu0 0.0
        %538 = vmatprep.subr.mxu0 0.0
        %539 = vmatpush1.msra.mxu0 0.0
        %540 = vmatprep.subr.mxu0 0.0
        %541 = vmatpush1.msra.mxu0 0.0
        %542 = vmatprep.subr.mxu0 0.0
        %543 = vmatpush1.msra.mxu0 0.0
        %544 = vmatprep.subr.mxu0 0.0
        %545 = vmatpush1.msra.mxu0 0.0
        %546 = vmatprep.subr.mxu0 0.0
        %547 = vmatpush1.msra.mxu0 0.0
        %548 = vmatprep.subr.mxu0 0.0
        %549 = vmatpush1.msra.mxu0 0.0
        %550 = vmatprep.subr.mxu0 0.0
        %551 = vmatpush1.msra.mxu0 0.0
        %552 = vmatprep.subr.mxu0 0.0
        %553 = vmatpush1.msra.mxu0 0.0
        %554 = vmatprep.subr.mxu0 0.0
        %555 = vmatpush1.msra.mxu0 0.0
        %556 = vmatprep.subr.mxu0 0.0
        %557 = vmatpush1.msra.mxu0 0.0
        %558 = vmatprep.subr.mxu0 0.0
        %559 = vmatpush1.msra.mxu0 0.0
        %560 = vmatprep.subr.mxu0 0.0
        %561 = vmatpush1.msra.mxu0 0.0
        %562 = vmatprep.subr.mxu0 0.0
        %563 = vmatpush1.msra.mxu0 0.0
        %564 = vmatprep.subr.mxu0 0.0
        %565 = vmatpush1.msra.mxu0 0.0
        %566 = vmatprep.subr.mxu0 0.0
        %567 = vmatpush1.msra.mxu0 0.0
        %568 = vmatprep.subr.mxu0 0.0
        %569 = vmatpush1.msra.mxu0 0.0
        %570 = vmatprep.subr.mxu0 0.0
        %571 = vmatpush1.msra.mxu0 0.0
        %572 = vmatprep.subr.mxu0 0.0
        %573 = vmatpush1.msra.mxu0 0.0
        %574 = vmatprep.mubr.f32.mxu0 0.0
        %575 = vmatmul.mubr.f32.gmra.mrb[0].mxu0 %v508
        %v576 = vpop.f32.mrb[0].mxu0
        %v577 = vadd.f32 0.0, %v576
        %v578 = vpop.f32.mrb[0].mxu0
        %v579 = vadd.f32 0.0, %v578
        %580 = vdwg.mxu0
        %v581 = vlaneseq
        %v582 = vshrl.u32 %v581, 7
        %v583 = vsub.s32 0, %v582
        %v584 = vrot.slane %v485, %v583
        %v585 = vadd.f32 %v577, %v584
        %vm586 = vcmp.ge.f32.partialorder %v585, 0.0
        %v587 = vmul.f32 %v585, 0.2
        %v588 = vsel %vm586, %v585, %v587
        %v589 = vmul.f32 %v577, %v577
        %v590 = vld [vmem:[%s8] sm:$0xff]
        %v591 = vld [vmem:[%s8 + $0x8] sm:$0xff]
        %v592 = vld [vmem:[%s8 + $0x10] sm:$0xff]
        %v593 = vld [vmem:[%s8 + $0x18] sm:$0xff]
        %v594 = vld [vmem:[%s8 + $0x20] sm:$0xff]
        %v595 = vld [vmem:[%s8 + $0x28] sm:$0xff]
        %597 = vrot.lane.b32.xlu0 %v589, 96
        %v598 = vpop.permute.xlu0 %597
        %vm599 = vcmask 392192
        %v600 = vsel %vm599, %v598, 0
        %602 = vmatprep.subr.mxu0 0.0
        %603 = vmatpush1.msra.mxu0 %v590
        %604 = vmatprep.subr.mxu0 0.0
        %605 = vmatpush1.msra.mxu0 %v591
        %606 = vmatprep.subr.mxu0 0.0
        %607 = vmatpush1.msra.mxu0 %v592
        %608 = vmatprep.subr.mxu0 0.0
        %609 = vmatpush1.msra.mxu0 %v593
        %610 = vmatprep.subr.mxu0 0.0
        %611 = vmatpush1.msra.mxu0 %v594
        %612 = vmatprep.subr.mxu0 0.0
        %613 = vmatpush1.msra.mxu0 %v595
        %614 = vmatprep.subr.mxu0 0.0
        %615 = vmatpush1.msra.mxu0 0.0
        %616 = vmatprep.subr.mxu0 0.0
        %617 = vmatpush1.msra.mxu0 0.0
        %618 = vmatprep.subr.mxu0 0.0
        %619 = vmatpush1.msra.mxu0 0.0
        %620 = vmatprep.subr.mxu0 0.0
        %621 = vmatpush1.msra.mxu0 0.0
        %622 = vmatprep.subr.mxu0 0.0
        %623 = vmatpush1.msra.mxu0 0.0
        %624 = vmatprep.subr.mxu0 0.0
        %625 = vmatpush1.msra.mxu0 0.0
        %626 = vmatprep.subr.mxu0 0.0
        %627 = vmatpush1.msra.mxu0 0.0
        %628 = vmatprep.subr.mxu0 0.0
        %629 = vmatpush1.msra.mxu0 0.0
        %630 = vmatprep.subr.mxu0 0.0
        %631 = vmatpush1.msra.mxu0 0.0
        %632 = vmatprep.subr.mxu0 0.0
        %633 = vmatpush1.msra.mxu0 0.0
        %634 = vmatprep.subr.mxu0 0.0
        %635 = vmatpush1.msra.mxu0 0.0
        %636 = vmatprep.subr.mxu0 0.0
        %637 = vmatpush1.msra.mxu0 0.0
        %638 = vmatprep.subr.mxu0 0.0
        %639 = vmatpush1.msra.mxu0 0.0
        %640 = vmatprep.subr.mxu0 0.0
        %641 = vmatpush1.msra.mxu0 0.0
        %642 = vmatprep.subr.mxu0 0.0
        %643 = vmatpush1.msra.mxu0 0.0
        %644 = vmatprep.subr.mxu0 0.0
        %645 = vmatpush1.msra.mxu0 0.0
        %646 = vmatprep.subr.mxu0 0.0
        %647 = vmatpush1.msra.mxu0 0.0
        %648 = vmatprep.subr.mxu0 0.0
        %649 = vmatpush1.msra.mxu0 0.0
        %650 = vmatprep.subr.mxu0 0.0
        %651 = vmatpush1.msra.mxu0 0.0
        %652 = vmatprep.subr.mxu0 0.0
        %653 = vmatpush1.msra.mxu0 0.0
        %654 = vmatprep.subr.mxu0 0.0
        %655 = vmatpush1.msra.mxu0 0.0
        %656 = vmatprep.subr.mxu0 0.0
        %657 = vmatpush1.msra.mxu0 0.0
        %658 = vmatprep.subr.mxu0 0.0
        %659 = vmatpush1.msra.mxu0 0.0
        %660 = vmatprep.subr.mxu0 0.0
        %661 = vmatpush1.msra.mxu0 0.0
        %662 = vmatprep.subr.mxu0 0.0
        %663 = vmatpush1.msra.mxu0 0.0
        %664 = vmatprep.subr.mxu0 0.0
        %665 = vmatpush1.msra.mxu0 0.0
        %666 = vmatprep.mubr.f32.mxu0 0.0
        %667 = vmatmul.mubr.f32.gmra.mrb[0].mxu0 %v600
        %v668 = vpop.f32.mrb[0].mxu0
        %v669 = vadd.f32 1.0, %v668
        %v670 = vpop.f32.mrb[0].mxu0
        %671 = vdwg.mxu0
        %v672 = vrsqrt.pop %v669
        %v673 = vmul.f32 %v669, %v672
        %vm674 = vcmp.eq.f32.partialorder %v669, inf
        %v675 = vsel %vm674, %v669, %v673
        %vm676 = vcmp.eq.f32.partialorder %v669, 0.0
        %v677 = vand.u32 %v669, 2147483648
        %v678 = vsel %vm676, %v677, %v675
        %v679 = vrsqrt.pop %v678
        %v680 = vld [vmem:[%s9] sm:$0xff]
        %v681 = vld [vmem:[%s9 + $0x8] sm:$0xff]
        %vm682 = vcmask 130048
        %v684 = vsel %vm682, %v679, 0
        %686 = vmatprep.subr.mxu0 0.0
        %687 = vmatpush1.msra.mxu0 %v680
        %688 = vmatprep.subr.mxu0 0.0
        %689 = vmatpush1.msra.mxu0 %v681
        %690 = vmatprep.subr.mxu0 0.0
        %691 = vmatpush1.msra.mxu0 0.0
        %692 = vmatprep.subr.mxu0 0.0
        %693 = vmatpush1.msra.mxu0 0.0
        %694 = vmatprep.subr.mxu0 0.0
        %695 = vmatpush1.msra.mxu0 0.0
        %696 = vmatprep.subr.mxu0 0.0
        %697 = vmatpush1.msra.mxu0 0.0
        %698 = vmatprep.subr.mxu0 0.0
        %699 = vmatpush1.msra.mxu0 0.0
        %700 = vmatprep.subr.mxu0 0.0
        %701 = vmatpush1.msra.mxu0 0.0
        %702 = vmatprep.subr.mxu0 0.0
        %703 = vmatpush1.msra.mxu0 0.0
        %704 = vmatprep.subr.mxu0 0.0
        %705 = vmatpush1.msra.mxu0 0.0
        %706 = vmatprep.subr.mxu0 0.0
        %707 = vmatpush1.msra.mxu0 0.0
        %708 = vmatprep.subr.mxu0 0.0
        %709 = vmatpush1.msra.mxu0 0.0
        %710 = vmatprep.subr.mxu0 0.0
        %711 = vmatpush1.msra.mxu0 0.0
        %712 = vmatprep.subr.mxu0 0.0
        %713 = vmatpush1.msra.mxu0 0.0
        %714 = vmatprep.subr.mxu0 0.0
        %715 = vmatpush1.msra.mxu0 0.0
        %716 = vmatprep.subr.mxu0 0.0
        %717 = vmatpush1.msra.mxu0 0.0
        %718 = vmatprep.subr.mxu0 0.0
        %719 = vmatpush1.msra.mxu0 0.0
        %720 = vmatprep.subr.mxu0 0.0
        %721 = vmatpush1.msra.mxu0 0.0
        %722 = vmatprep.subr.mxu0 0.0
        %723 = vmatpush1.msra.mxu0 0.0
        %724 = vmatprep.subr.mxu0 0.0
        %725 = vmatpush1.msra.mxu0 0.0
        %726 = vmatprep.subr.mxu0 0.0
        %727 = vmatpush1.msra.mxu0 0.0
        %728 = vmatprep.subr.mxu0 0.0
        %729 = vmatpush1.msra.mxu0 0.0
        %730 = vmatprep.subr.mxu0 0.0
        %731 = vmatpush1.msra.mxu0 0.0
        %732 = vmatprep.subr.mxu0 0.0
        %733 = vmatpush1.msra.mxu0 0.0
        %734 = vmatprep.subr.mxu0 0.0
        %735 = vmatpush1.msra.mxu0 0.0
        %736 = vmatprep.subr.mxu0 0.0
        %737 = vmatpush1.msra.mxu0 0.0
        %738 = vmatprep.subr.mxu0 0.0
        %739 = vmatpush1.msra.mxu0 0.0
        %740 = vmatprep.subr.mxu0 0.0
        %741 = vmatpush1.msra.mxu0 0.0
        %742 = vmatprep.subr.mxu0 0.0
        %743 = vmatpush1.msra.mxu0 0.0
        %744 = vmatprep.subr.mxu0 0.0
        %745 = vmatpush1.msra.mxu0 0.0
        %746 = vmatprep.subr.mxu0 0.0
        %747 = vmatpush1.msra.mxu0 0.0
        %748 = vmatprep.subr.mxu0 0.0
        %749 = vmatpush1.msra.mxu0 0.0
        %750 = vmatprep.mubr.f32.mxu0 0.0
        %751 = vmatmul.mubr.f32.gmra.mrb[0].mxu0 %v684
        %v752 = vpop.f32.mrb[0].mxu0
        %v753 = vadd.f32 0.0, %v752
        %v754 = vpop.f32.mrb[0].mxu0
        %755 = vdwg.mxu0
        %757 = vrot.lane.b32.xlu0 %v753, 32
        %v758 = vpop.permute.xlu0 %757
        %v760 = vmul.f32 %v577, %v758
        %v761 = vsel %vm483, %v588, %v760
        %v762 = vld [vmem:[#allocation4] sm:$0xff]
        %v763 = vld [vmem:[#allocation4 + $0x8] sm:$0xff]
        %v764 = vld [vmem:[#allocation4 + $0x10] sm:$0xff]
        %v765 = vld [vmem:[#allocation4 + $0x18] sm:$0xff]
        %v766 = vld [vmem:[#allocation4 + $0x20] sm:$0xff]
        %v767 = vld [vmem:[#allocation4 + $0x28] sm:$0xff]
        %v768 = vld [vmem:[#allocation4 + $0x30] sm:$0xff]
        %v769 = vld [vmem:[#allocation4 + $0x38] sm:$0xff]
        %v770 = vld [vmem:[#allocation4 + $0x40] sm:$0xff]
        %v771 = vld [vmem:[#allocation4 + $0x48] sm:$0xff]
        %v773 = vsel %vm506, %v761, 0
        %775 = vmatprep.subr.mxu0 0.0
        %776 = vmatpush1.msra.mxu0 %v762
        %777 = vmatprep.subr.mxu0 0.0
        %778 = vmatpush1.msra.mxu0 %v763
        %779 = vmatprep.subr.mxu0 0.0
        %780 = vmatpush1.msra.mxu0 %v764
        %781 = vmatprep.subr.mxu0 0.0
        %782 = vmatpush1.msra.mxu0 %v765
        %783 = vmatprep.subr.mxu0 0.0
        %784 = vmatpush1.msra.mxu0 %v766
        %785 = vmatprep.subr.mxu0 0.0
        %786 = vmatpush1.msra.mxu0 %v767
        %787 = vmatprep.subr.mxu0 0.0
        %788 = vmatpush1.msra.mxu0 %v768
        %789 = vmatprep.subr.mxu0 0.0
        %790 = vmatpush1.msra.mxu0 %v769
        %791 = vmatprep.subr.mxu0 0.0
        %792 = vmatpush1.msra.mxu0 %v770
        %793 = vmatprep.subr.mxu0 0.0
        %794 = vmatpush1.msra.mxu0 %v771
        %795 = vmatprep.subr.mxu0 0.0
        %796 = vmatpush1.msra.mxu0 0.0
        %797 = vmatprep.subr.mxu0 0.0
        %798 = vmatpush1.msra.mxu0 0.0
        %799 = vmatprep.subr.mxu0 0.0
        %800 = vmatpush1.msra.mxu0 0.0
        %801 = vmatprep.subr.mxu0 0.0
        %802 = vmatpush1.msra.mxu0 0.0
        %803 = vmatprep.subr.mxu0 0.0
        %804 = vmatpush1.msra.mxu0 0.0
        %805 = vmatprep.subr.mxu0 0.0
        %806 = vmatpush1.msra.mxu0 0.0
        %807 = vmatprep.subr.mxu0 0.0
        %808 = vmatpush1.msra.mxu0 0.0
        %809 = vmatprep.subr.mxu0 0.0
        %810 = vmatpush1.msra.mxu0 0.0
        %811 = vmatprep.subr.mxu0 0.0
        %812 = vmatpush1.msra.mxu0 0.0
        %813 = vmatprep.subr.mxu0 0.0
        %814 = vmatpush1.msra.mxu0 0.0
        %815 = vmatprep.subr.mxu0 0.0
        %816 = vmatpush1.msra.mxu0 0.0
        %817 = vmatprep.subr.mxu0 0.0
        %818 = vmatpush1.msra.mxu0 0.0
        %819 = vmatprep.subr.mxu0 0.0
        %820 = vmatpush1.msra.mxu0 0.0
        %821 = vmatprep.subr.mxu0 0.0
        %822 = vmatpush1.msra.mxu0 0.0
        %823 = vmatprep.subr.mxu0 0.0
        %824 = vmatpush1.msra.mxu0 0.0
        %825 = vmatprep.subr.mxu0 0.0
        %826 = vmatpush1.msra.mxu0 0.0
        %827 = vmatprep.subr.mxu0 0.0
        %828 = vmatpush1.msra.mxu0 0.0
        %829 = vmatprep.subr.mxu0 0.0
        %830 = vmatpush1.msra.mxu0 0.0
        %831 = vmatprep.subr.mxu0 0.0
        %832 = vmatpush1.msra.mxu0 0.0
        %833 = vmatprep.subr.mxu0 0.0
        %834 = vmatpush1.msra.mxu0 0.0
        %835 = vmatprep.subr.mxu0 0.0
        %836 = vmatpush1.msra.mxu0 0.0
        %837 = vmatprep.subr.mxu0 0.0
        %838 = vmatpush1.msra.mxu0 0.0
        %839 = vmatprep.mubr.f32.mxu0 0.0
        %840 = vmatmul.mubr.f32.gmra.mrb[0].mxu0 %v773
        %v841 = vpop.f32.mrb[0].mxu0
        %v842 = vadd.f32 0.0, %v841
        %v843 = vpop.f32.mrb[0].mxu0
        %844 = vdwg.mxu0
        %v845 = vlaneseq
        %v846 = vshrl.u32 %v845, 7
        %v847 = vsub.s32 1, %v846
        %v848 = vrot.slane %v485, %v847
        %v849 = vadd.f32 %v842, %v848
        %vm850 = vcmp.ge.f32.partialorder %v849, 0.0
        %v851 = vmul.f32 %v849, 0.2
        %v852 = vsel %vm850, %v849, %v851
        %v853 = vmul.f32 %v842, %v842
        %855 = vrot.lane.b32.xlu0 %v853, 96
        %v856 = vpop.permute.xlu0 %855
        %v857 = vsel %vm599, %v856, 0
        %859 = vmatprep.subr.mxu0 0.0
        %860 = vmatpush1.msra.mxu0 %v590
        %861 = vmatprep.subr.mxu0 0.0
        %862 = vmatpush1.msra.mxu0 %v591
        %863 = vmatprep.subr.mxu0 0.0
        %864 = vmatpush1.msra.mxu0 %v592
        %865 = vmatprep.subr.mxu0 0.0
        %866 = vmatpush1.msra.mxu0 %v593
        %867 = vmatprep.subr.mxu0 0.0
        %868 = vmatpush1.msra.mxu0 %v594
        %869 = vmatprep.subr.mxu0 0.0
        %870 = vmatpush1.msra.mxu0 %v595
        %871 = vmatprep.subr.mxu0 0.0
        %872 = vmatpush1.msra.mxu0 0.0
        %873 = vmatprep.subr.mxu0 0.0
        %874 = vmatpush1.msra.mxu0 0.0
        %875 = vmatprep.subr.mxu0 0.0
        %876 = vmatpush1.msra.mxu0 0.0
        %877 = vmatprep.subr.mxu0 0.0
        %878 = vmatpush1.msra.mxu0 0.0
        %879 = vmatprep.subr.mxu0 0.0
        %880 = vmatpush1.msra.mxu0 0.0
        %881 = vmatprep.subr.mxu0 0.0
        %882 = vmatpush1.msra.mxu0 0.0
        %883 = vmatprep.subr.mxu0 0.0
        %884 = vmatpush1.msra.mxu0 0.0
        %885 = vmatprep.subr.mxu0 0.0
        %886 = vmatpush1.msra.mxu0 0.0
        %887 = vmatprep.subr.mxu0 0.0
        %888 = vmatpush1.msra.mxu0 0.0
        %889 = vmatprep.subr.mxu0 0.0
        %890 = vmatpush1.msra.mxu0 0.0
        %891 = vmatprep.subr.mxu0 0.0
        %892 = vmatpush1.msra.mxu0 0.0
        %893 = vmatprep.subr.mxu0 0.0
        %894 = vmatpush1.msra.mxu0 0.0
        %895 = vmatprep.subr.mxu0 0.0
        %896 = vmatpush1.msra.mxu0 0.0
        %897 = vmatprep.subr.mxu0 0.0
        %898 = vmatpush1.msra.mxu0 0.0
        %899 = vmatprep.subr.mxu0 0.0
        %900 = vmatpush1.msra.mxu0 0.0
        %901 = vmatprep.subr.mxu0 0.0
        %902 = vmatpush1.msra.mxu0 0.0
        %903 = vmatprep.subr.mxu0 0.0
        %904 = vmatpush1.msra.mxu0 0.0
        %905 = vmatprep.subr.mxu0 0.0
        %906 = vmatpush1.msra.mxu0 0.0
        %907 = vmatprep.subr.mxu0 0.0
        %908 = vmatpush1.msra.mxu0 0.0
        %909 = vmatprep.subr.mxu0 0.0
        %910 = vmatpush1.msra.mxu0 0.0
        %911 = vmatprep.subr.mxu0 0.0
        %912 = vmatpush1.msra.mxu0 0.0
        %913 = vmatprep.subr.mxu0 0.0
        %914 = vmatpush1.msra.mxu0 0.0
        %915 = vmatprep.subr.mxu0 0.0
        %916 = vmatpush1.msra.mxu0 0.0
        %917 = vmatprep.subr.mxu0 0.0
        %918 = vmatpush1.msra.mxu0 0.0
        %919 = vmatprep.subr.mxu0 0.0
        %920 = vmatpush1.msra.mxu0 0.0
        %921 = vmatprep.subr.mxu0 0.0
        %922 = vmatpush1.msra.mxu0 0.0
        %923 = vmatprep.mubr.f32.mxu0 0.0
        %924 = vmatmul.mubr.f32.gmra.mrb[0].mxu0 %v857
        %v925 = vpop.f32.mrb[0].mxu0
        %v926 = vadd.f32 1.0, %v925
        %v927 = vpop.f32.mrb[0].mxu0
        %928 = vdwg.mxu0
        %v929 = vrsqrt.pop %v926
        %v930 = vmul.f32 %v926, %v929
        %vm931 = vcmp.eq.f32.partialorder %v926, inf
        %v932 = vsel %vm931, %v926, %v930
        %vm933 = vcmp.eq.f32.partialorder %v926, 0.0
        %v934 = vand.u32 %v926, 2147483648
        %v935 = vsel %vm933, %v934, %v932
        %v936 = vrsqrt.pop %v935
        %v938 = vsel %vm682, %v936, 0
        %940 = vmatprep.subr.mxu0 0.0
        %941 = vmatpush1.msra.mxu0 %v680
        %942 = vmatprep.subr.mxu0 0.0
        %943 = vmatpush1.msra.mxu0 %v681
        %944 = vmatprep.subr.mxu0 0.0
        %945 = vmatpush1.msra.mxu0 0.0
        %946 = vmatprep.subr.mxu0 0.0
        %947 = vmatpush1.msra.mxu0 0.0
        %948 = vmatprep.subr.mxu0 0.0
        %949 = vmatpush1.msra.mxu0 0.0
        %950 = vmatprep.subr.mxu0 0.0
        %951 = vmatpush1.msra.mxu0 0.0
        %952 = vmatprep.subr.mxu0 0.0
        %953 = vmatpush1.msra.mxu0 0.0
        %954 = vmatprep.subr.mxu0 0.0
        %955 = vmatpush1.msra.mxu0 0.0
        %956 = vmatprep.subr.mxu0 0.0
        %957 = vmatpush1.msra.mxu0 0.0
        %958 = vmatprep.subr.mxu0 0.0
        %959 = vmatpush1.msra.mxu0 0.0
        %960 = vmatprep.subr.mxu0 0.0
        %961 = vmatpush1.msra.mxu0 0.0
        %962 = vmatprep.subr.mxu0 0.0
        %963 = vmatpush1.msra.mxu0 0.0
        %964 = vmatprep.subr.mxu0 0.0
        %965 = vmatpush1.msra.mxu0 0.0
        %966 = vmatprep.subr.mxu0 0.0
        %967 = vmatpush1.msra.mxu0 0.0
        %968 = vmatprep.subr.mxu0 0.0
        %969 = vmatpush1.msra.mxu0 0.0
        %970 = vmatprep.subr.mxu0 0.0
        %971 = vmatpush1.msra.mxu0 0.0
        %972 = vmatprep.subr.mxu0 0.0
        %973 = vmatpush1.msra.mxu0 0.0
        %974 = vmatprep.subr.mxu0 0.0
        %975 = vmatpush1.msra.mxu0 0.0
        %976 = vmatprep.subr.mxu0 0.0
        %977 = vmatpush1.msra.mxu0 0.0
        %978 = vmatprep.subr.mxu0 0.0
        %979 = vmatpush1.msra.mxu0 0.0
        %980 = vmatprep.subr.mxu0 0.0
        %981 = vmatpush1.msra.mxu0 0.0
        %982 = vmatprep.subr.mxu0 0.0
        %983 = vmatpush1.msra.mxu0 0.0
        %984 = vmatprep.subr.mxu0 0.0
        %985 = vmatpush1.msra.mxu0 0.0
        %986 = vmatprep.subr.mxu0 0.0
        %987 = vmatpush1.msra.mxu0 0.0
        %988 = vmatprep.subr.mxu0 0.0
        %989 = vmatpush1.msra.mxu0 0.0
        %990 = vmatprep.subr.mxu0 0.0
        %991 = vmatpush1.msra.mxu0 0.0
        %992 = vmatprep.subr.mxu0 0.0
        %993 = vmatpush1.msra.mxu0 0.0
        %994 = vmatprep.subr.mxu0 0.0
        %995 = vmatpush1.msra.mxu0 0.0
        %996 = vmatprep.subr.mxu0 0.0
        %997 = vmatpush1.msra.mxu0 0.0
        %998 = vmatprep.subr.mxu0 0.0
        %999 = vmatpush1.msra.mxu0 0.0
        %1000 = vmatprep.subr.mxu0 0.0
        %1001 = vmatpush1.msra.mxu0 0.0
        %1002 = vmatprep.subr.mxu0 0.0
        %1003 = vmatpush1.msra.mxu0 0.0
        %1004 = vmatprep.mubr.f32.mxu0 0.0
        %1005 = vmatmul.mubr.f32.gmra.mrb[0].mxu0 %v938
        %v1006 = vpop.f32.mrb[0].mxu0
        %v1007 = vadd.f32 0.0, %v1006
        %v1008 = vpop.f32.mrb[0].mxu0
        %1009 = vdwg.mxu0
        %1011 = vrot.lane.b32.xlu0 %v1007, 32
        %v1012 = vpop.permute.xlu0 %1011
        %v1014 = vmul.f32 %v842, %v1012
        %1016 = vrot.lane.b32.xlu0 %v579, 120
        %v1017 = vpop.permute.xlu0 %1016
        %v1019 = vmul.f32 %v579, %v1017
        %1021 = vrot.lane.b32.xlu0 %v577, 104
        %v1022 = vpop.permute.xlu0 %1021
        %v1024 = vmul.f32 %v577, %v1022
        %1025 = vrot.lane.b32.xlu0 %v577, 40
        %v1026 = vpop.permute.xlu0 %1025
        %v1028 = vmul.f32 %v579, %v1026
        %1030 = vrot.lane.b32.xlu0 %v1019, 80
        %v1031 = vpop.permute.xlu0 %1030
        %1034 = vrot.lane.b32.xlu0 %v1024, 8
        %v1035 = vpop.permute.xlu0 %1034
        %1038 = vrot.lane.b32.xlu0 %v1028, 96
        %v1039 = vpop.permute.xlu0 %1038
        %v1041 = vsel %vm483, %v852, %v1014
        %v1042 = vsel %vm506, %v1041, %v1031
        %vm1043 = vcmask 719872
        %v1044 = vsel %vm1043, %v1042, %v1035
        %vm1045 = vcmask 916480
        %v1046 = vsel %vm1045, %v1044, %v1039
        %v1047 = vld [vmem:[#allocation6] sm:$0xff]
        %v1048 = vld [vmem:[#allocation6 + $0x8] sm:$0xff]
        %v1049 = vld [vmem:[#allocation6 + $0x10] sm:$0xff]
        %v1050 = vld [vmem:[#allocation6 + $0x18] sm:$0xff]
        %v1051 = vld [vmem:[#allocation6 + $0x20] sm:$0xff]
        %v1052 = vld [vmem:[#allocation6 + $0x28] sm:$0xff]
        %v1053 = vld [vmem:[#allocation6 + $0x30] sm:$0xff]
        %v1054 = vld [vmem:[#allocation6 + $0x38] sm:$0xff]
        %v1055 = vld [vmem:[#allocation6 + $0x40] sm:$0xff]
        %v1056 = vld [vmem:[#allocation6 + $0x48] sm:$0xff]
        %v1057 = vld [vmem:[#allocation6 + $0x50] sm:$0xff]
        %v1058 = vld [vmem:[#allocation6 + $0x58] sm:$0xff]
        %v1059 = vld [vmem:[#allocation6 + $0x60] sm:$0xff]
        %v1060 = vld [vmem:[#allocation6 + $0x68] sm:$0xff]
        %v1061 = vld [vmem:[#allocation6 + $0x70] sm:$0xff]
        %v1062 = vld [vmem:[#allocation6 + $0x78] sm:$0xff]
        %v1063 = vld [vmem:[#allocation6 + $0x80] sm:$0xff]
        %v1064 = vlaneseq
        %v1065 = vshrl.u32 %v1064, 7
        %v1066 = vsub.s32 2, %v1065
        %v1067 = vrot.slane %v485, %v1066
        %vm1068 = vcmask 64512
        %v1069 = vsel %vm1068, %v1039, 0
        %1071 = vmatprep.subr.mxu0 0.0
        %1072 = vmatpush1.msra.mxu0 %v1047
        %1073 = vmatprep.subr.mxu0 0.0
        %1074 = vmatpush1.msra.mxu0 %v1048
        %1075 = vmatprep.subr.mxu0 0.0
        %1076 = vmatpush1.msra.mxu0 %v1049
        %1077 = vmatprep.subr.mxu0 0.0
        %1078 = vmatpush1.msra.mxu0 %v1050
        %1079 = vmatprep.subr.mxu0 0.0
        %1080 = vmatpush1.msra.mxu0 %v1051
        %1081 = vmatprep.subr.mxu0 0.0
        %1082 = vmatpush1.msra.mxu0 %v1052
        %1083 = vmatprep.subr.mxu0 0.0
        %1084 = vmatpush1.msra.mxu0 %v1053
        %1085 = vmatprep.subr.mxu0 0.0
        %1086 = vmatpush1.msra.mxu0 %v1054
        %1087 = vmatprep.subr.mxu0 0.0
        %1088 = vmatpush1.msra.mxu0 %v1055
        %1089 = vmatprep.subr.mxu0 0.0
        %1090 = vmatpush1.msra.mxu0 %v1056
        %1091 = vmatprep.subr.mxu0 0.0
        %1092 = vmatpush1.msra.mxu0 %v1057
        %1093 = vmatprep.subr.mxu0 0.0
        %1094 = vmatpush1.msra.mxu0 %v1058
        %1095 = vmatprep.subr.mxu0 0.0
        %1096 = vmatpush1.msra.mxu0 %v1059
        %1097 = vmatprep.subr.mxu0 0.0
        %1098 = vmatpush1.msra.mxu0 %v1060
        %1099 = vmatprep.subr.mxu0 0.0
        %1100 = vmatpush1.msra.mxu0 %v1061
        %1101 = vmatprep.subr.mxu0 0.0
        %1102 = vmatpush1.msra.mxu0 %v1062
        %1103 = vmatprep.subr.mxu0 0.0
        %1104 = vmatpush1.msra.mxu0 %v1063
        %1105 = vmatprep.subr.mxu0 0.0
        %1106 = vmatpush1.msra.mxu0 0.0
        %1107 = vmatprep.subr.mxu0 0.0
        %1108 = vmatpush1.msra.mxu0 0.0
        %1109 = vmatprep.subr.mxu0 0.0
        %1110 = vmatpush1.msra.mxu0 0.0
        %1111 = vmatprep.subr.mxu0 0.0
        %1112 = vmatpush1.msra.mxu0 0.0
        %1113 = vmatprep.subr.mxu0 0.0
        %1114 = vmatpush1.msra.mxu0 0.0
        %1115 = vmatprep.subr.mxu0 0.0
        %1116 = vmatpush1.msra.mxu0 0.0
        %1117 = vmatprep.subr.mxu0 0.0
        %1118 = vmatpush1.msra.mxu0 0.0
        %1119 = vmatprep.subr.mxu0 0.0
        %1120 = vmatpush1.msra.mxu0 0.0
        %1121 = vmatprep.subr.mxu0 0.0
        %1122 = vmatpush1.msra.mxu0 0.0
        %1123 = vmatprep.subr.mxu0 0.0
        %1124 = vmatpush1.msra.mxu0 0.0
        %1125 = vmatprep.subr.mxu0 0.0
        %1126 = vmatpush1.msra.mxu0 0.0
        %1127 = vmatprep.subr.mxu0 0.0
        %1128 = vmatpush1.msra.mxu0 0.0
        %1129 = vmatprep.subr.mxu0 0.0
        %1130 = vmatpush1.msra.mxu0 0.0
        %1131 = vmatprep.subr.mxu0 0.0
        %1132 = vmatpush1.msra.mxu0 0.0
        %1133 = vmatprep.subr.mxu0 0.0
        %1134 = vmatpush1.msra.mxu0 0.0
        %1135 = vmatprep.mubr.f32.mxu0 %v1069
        %1136 = vmatmul.mubr.f32.gmra.mrb[0].mxu0 %v1046
        %v1137 = vpop.f32.mrb[0].mxu0
        %v1138 = vadd.f32 %v1067, %v1137
        %v1139 = vpop.f32.mrb[0].mxu0
        %1140 = vdwg.mxu0
        %v1141 = vmul.f32 %v1138, %v1138
        %1143 = vrot.lane.b32.xlu0 %v1141, 80
        %v1144 = vpop.permute.xlu0 %1143
        %v1146 = vsel %vm506, %v1138, %v1144
        %v1147 = vld [vmem:[%s5] sm:$0xff]
        %v1148 = vld [vmem:[%s5 + $0x8] sm:$0xff]
        %v1149 = vld [vmem:[%s5 + $0x10] sm:$0xff]
        %v1150 = vld [vmem:[%s5 + $0x18] sm:$0xff]
        %v1151 = vld [vmem:[%s5 + $0x20] sm:$0xff]
        %v1152 = vld [vmem:[%s5 + $0x28] sm:$0xff]
        %v1153 = vld [vmem:[%s5 + $0x30] sm:$0xff]
        %v1154 = vld [vmem:[%s5 + $0x38] sm:$0xff]
        %v1155 = vld [vmem:[%s5 + $0x40] sm:$0xff]
        %v1156 = vld [vmem:[%s5 + $0x48] sm:$0xff]
        %v1157 = vld [vmem:[%s5 + $0x50] sm:$0xff]
        %v1158 = vld [vmem:[%s5 + $0x58] sm:$0xff]
        %v1159 = vld [vmem:[%s5 + $0x60] sm:$0xff]
        %v1160 = vld [vmem:[%s5 + $0x68] sm:$0xff]
        %v1161 = vld [vmem:[%s5 + $0x70] sm:$0xff]
        %v1162 = vld [vmem:[%s5 + $0x78] sm:$0xff]
        %v1163 = vld [vmem:[%s5 + $0x80] sm:$0xff]
        %v1164 = vld [vmem:[%s5 + $0x88] sm:$0xff]
        %v1165 = vld [vmem:[%s5 + $0x90] sm:$0xff]
        %v1166 = vld [vmem:[%s5 + $0x98] sm:$0xff]
        %v1167 = vsel %vm483, %v1144, 0
        %1169 = vmatprep.subr.mxu0 0.0
        %1170 = vmatpush1.msra.mxu0 %v1147
        %1171 = vmatprep.subr.mxu0 0.0
        %1172 = vmatpush1.msra.mxu0 %v1148
        %1173 = vmatprep.subr.mxu0 0.0
        %1174 = vmatpush1.msra.mxu0 %v1149
        %1175 = vmatprep.subr.mxu0 0.0
        %1176 = vmatpush1.msra.mxu0 %v1150
        %1177 = vmatprep.subr.mxu0 0.0
        %1178 = vmatpush1.msra.mxu0 %v1151
        %1179 = vmatprep.subr.mxu0 0.0
        %1180 = vmatpush1.msra.mxu0 %v1152
        %1181 = vmatprep.subr.mxu0 0.0
        %1182 = vmatpush1.msra.mxu0 %v1153
        %1183 = vmatprep.subr.mxu0 0.0
        %1184 = vmatpush1.msra.mxu0 %v1154
        %1185 = vmatprep.subr.mxu0 0.0
        %1186 = vmatpush1.msra.mxu0 %v1155
        %1187 = vmatprep.subr.mxu0 0.0
        %1188 = vmatpush1.msra.mxu0 %v1156
        %1189 = vmatprep.subr.mxu0 0.0
        %1190 = vmatpush1.msra.mxu0 %v1157
        %1191 = vmatprep.subr.mxu0 0.0
        %1192 = vmatpush1.msra.mxu0 %v1158
        %1193 = vmatprep.subr.mxu0 0.0
        %1194 = vmatpush1.msra.mxu0 %v1159
        %1195 = vmatprep.subr.mxu0 0.0
        %1196 = vmatpush1.msra.mxu0 %v1160
        %1197 = vmatprep.subr.mxu0 0.0
        %1198 = vmatpush1.msra.mxu0 %v1161
        %1199 = vmatprep.subr.mxu0 0.0
        %1200 = vmatpush1.msra.mxu0 %v1162
        %1201 = vmatprep.subr.mxu0 0.0
        %1202 = vmatpush1.msra.mxu0 %v1163
        %1203 = vmatprep.subr.mxu0 0.0
        %1204 = vmatpush1.msra.mxu0 %v1164
        %1205 = vmatprep.subr.mxu0 0.0
        %1206 = vmatpush1.msra.mxu0 %v1165
        %1207 = vmatprep.subr.mxu0 0.0
        %1208 = vmatpush1.msra.mxu0 %v1166
        %1209 = vmatprep.subr.mxu0 0.0
        %1210 = vmatpush1.msra.mxu0 0.0
        %1211 = vmatprep.subr.mxu0 0.0
        %1212 = vmatpush1.msra.mxu0 0.0
        %1213 = vmatprep.subr.mxu0 0.0
        %1214 = vmatpush1.msra.mxu0 0.0
        %1215 = vmatprep.subr.mxu0 0.0
        %1216 = vmatpush1.msra.mxu0 0.0
        %1217 = vmatprep.subr.mxu0 0.0
        %1218 = vmatpush1.msra.mxu0 0.0
        %1219 = vmatprep.subr.mxu0 0.0
        %1220 = vmatpush1.msra.mxu0 0.0
        %1221 = vmatprep.subr.mxu0 0.0
        %1222 = vmatpush1.msra.mxu0 0.0
        %1223 = vmatprep.subr.mxu0 0.0
        %1224 = vmatpush1.msra.mxu0 0.0
        %1225 = vmatprep.subr.mxu0 0.0
        %1226 = vmatpush1.msra.mxu0 0.0
        %1227 = vmatprep.subr.mxu0 0.0
        %1228 = vmatpush1.msra.mxu0 0.0
        %1229 = vmatprep.subr.mxu0 0.0
        %1230 = vmatpush1.msra.mxu0 0.0
        %1231 = vmatprep.subr.mxu0 0.0
        %1232 = vmatpush1.msra.mxu0 0.0
        %1233 = vmatprep.mubr.f32.mxu0 %v1167
        %1234 = vmatmul.mubr.f32.gmra.mrb[0].mxu0 %v1146
        %v1235 = vpop.f32.mrb[0].mxu0
        %v1236 = vadd.f32 0.0, %v1235
        %v1237 = vpop.f32.mrb[0].mxu0
        %1238 = vdwg.mxu0
        %v1239 = vmul.f32 %v1236, %v1236
        %1241 = vrot.lane.b32.xlu0 %v1239, 4
        %v1242 = vpop.permute.xlu0 %1241
        %v1244 = vsub.f32 %v1236, %v1242
        %v1245 = vmax.f32 %v1244, 0.0
        %v1246 = vadd.f32 %v1245, 1e-05
        %v1247 = vrsqrt.pop %v1246
        %v1248 = vadd.f32 %v1236, 1e-05
        %v1249 = vrsqrt.pop %v1248
        %vm1250 = vcmask 31744
        %v1251 = vsel %vm1250, %v1236, %v1247
        %v1252 = vsel %vm1068, %v1251, %v1249
        %v1253 = vld [vmem:[#allocation7] sm:$0xff]
        %v1254 = vld [vmem:[#allocation7 + $0x8] sm:$0xf]
        %vm1255 = vcmask 97280
        %v1257 = vsel %vm1255, %v1252, 0
        %vm1259 = vcmask 1043456
        %v1261 = vsel %vm1259, %v1254, 0
        %1263 = vmatprep.subr.mxu0 0.0
        %1264 = vmatpush1.msra.mxu0 %v1253
        %1265 = vmatprep.subr.mxu0 0.0
        %1266 = vmatpush1.msra.mxu0 %v1261
        %1267 = vmatprep.subr.mxu0 0.0
        %1268 = vmatpush1.msra.mxu0 0.0
        %1269 = vmatprep.subr.mxu0 0.0
        %1270 = vmatpush1.msra.mxu0 0.0
        %1271 = vmatprep.subr.mxu0 0.0
        %1272 = vmatpush1.msra.mxu0 0.0
        %1273 = vmatprep.subr.mxu0 0.0
        %1274 = vmatpush1.msra.mxu0 0.0
        %1275 = vmatprep.subr.mxu0 0.0
        %1276 = vmatpush1.msra.mxu0 0.0
        %1277 = vmatprep.subr.mxu0 0.0
        %1278 = vmatpush1.msra.mxu0 0.0
        %1279 = vmatprep.subr.mxu0 0.0
        %1280 = vmatpush1.msra.mxu0 0.0
        %1281 = vmatprep.subr.mxu0 0.0
        %1282 = vmatpush1.msra.mxu0 0.0
        %1283 = vmatprep.subr.mxu0 0.0
        %1284 = vmatpush1.msra.mxu0 0.0
        %1285 = vmatprep.subr.mxu0 0.0
        %1286 = vmatpush1.msra.mxu0 0.0
        %1287 = vmatprep.subr.mxu0 0.0
        %1288 = vmatpush1.msra.mxu0 0.0
        %1289 = vmatprep.subr.mxu0 0.0
        %1290 = vmatpush1.msra.mxu0 0.0
        %1291 = vmatprep.subr.mxu0 0.0
        %1292 = vmatpush1.msra.mxu0 0.0
        %1293 = vmatprep.subr.mxu0 0.0
        %1294 = vmatpush1.msra.mxu0 0.0
        %1295 = vmatprep.subr.mxu0 0.0
        %1296 = vmatpush1.msra.mxu0 0.0
        %1297 = vmatprep.subr.mxu0 0.0
        %1298 = vmatpush1.msra.mxu0 0.0
        %1299 = vmatprep.subr.mxu0 0.0
        %1300 = vmatpush1.msra.mxu0 0.0
        %1301 = vmatprep.subr.mxu0 0.0
        %1302 = vmatpush1.msra.mxu0 0.0
        %1303 = vmatprep.subr.mxu0 0.0
        %1304 = vmatpush1.msra.mxu0 0.0
        %1305 = vmatprep.subr.mxu0 0.0
        %1306 = vmatpush1.msra.mxu0 0.0
        %1307 = vmatprep.subr.mxu0 0.0
        %1308 = vmatpush1.msra.mxu0 0.0
        %1309 = vmatprep.subr.mxu0 0.0
        %1310 = vmatpush1.msra.mxu0 0.0
        %1311 = vmatprep.subr.mxu0 0.0
        %1312 = vmatpush1.msra.mxu0 0.0
        %1313 = vmatprep.subr.mxu0 0.0
        %1314 = vmatpush1.msra.mxu0 0.0
        %1315 = vmatprep.subr.mxu0 0.0
        %1316 = vmatpush1.msra.mxu0 0.0
        %1317 = vmatprep.subr.mxu0 0.0
        %1318 = vmatpush1.msra.mxu0 0.0
        %1319 = vmatprep.subr.mxu0 0.0
        %1320 = vmatpush1.msra.mxu0 0.0
        %1321 = vmatprep.subr.mxu0 0.0
        %1322 = vmatpush1.msra.mxu0 0.0
        %1323 = vmatprep.subr.mxu0 0.0
        %1324 = vmatpush1.msra.mxu0 0.0
        %1325 = vmatprep.subr.mxu0 0.0
        %1326 = vmatpush1.msra.mxu0 0.0
        %1327 = vmatprep.mubr.f32.mxu0 0.0
        %1328 = vmatmul.mubr.f32.gmra.mrb[0].mxu0 %v1257
        %v1329 = vpop.f32.mrb[0].mxu0
        %v1330 = vadd.f32 0.0, %v1329
        %v1331 = vpop.f32.mrb[0].mxu0
        %1332 = vdwg.mxu0
        %v1333 = vld [vmem:[#allocation9] sm:$0xff]
        %v1334 = vld [vmem:[#allocation9 + $0x8] sm:$0xf]
        %v1336 = vsel %vm1259, %v1334, 0
        %1338 = vmatprep.subr.mxu0 0.0
        %1339 = vmatpush1.msra.mxu0 %v1333
        %1340 = vmatprep.subr.mxu0 0.0
        %1341 = vmatpush1.msra.mxu0 %v1336
        %1342 = vmatprep.subr.mxu0 0.0
        %1343 = vmatpush1.msra.mxu0 0.0
        %1344 = vmatprep.subr.mxu0 0.0
        %1345 = vmatpush1.msra.mxu0 0.0
        %1346 = vmatprep.subr.mxu0 0.0
        %1347 = vmatpush1.msra.mxu0 0.0
        %1348 = vmatprep.subr.mxu0 0.0
        %1349 = vmatpush1.msra.mxu0 0.0
        %1350 = vmatprep.subr.mxu0 0.0
        %1351 = vmatpush1.msra.mxu0 0.0
        %1352 = vmatprep.subr.mxu0 0.0
        %1353 = vmatpush1.msra.mxu0 0.0
        %1354 = vmatprep.subr.mxu0 0.0
        %1355 = vmatpush1.msra.mxu0 0.0
        %1356 = vmatprep.subr.mxu0 0.0
        %1357 = vmatpush1.msra.mxu0 0.0
        %1358 = vmatprep.subr.mxu0 0.0
        %1359 = vmatpush1.msra.mxu0 0.0
        %1360 = vmatprep.subr.mxu0 0.0
        %1361 = vmatpush1.msra.mxu0 0.0
        %1362 = vmatprep.subr.mxu0 0.0
        %1363 = vmatpush1.msra.mxu0 0.0
        %1364 = vmatprep.subr.mxu0 0.0
        %1365 = vmatpush1.msra.mxu0 0.0
        %1366 = vmatprep.subr.mxu0 0.0
        %1367 = vmatpush1.msra.mxu0 0.0
        %1368 = vmatprep.subr.mxu0 0.0
        %1369 = vmatpush1.msra.mxu0 0.0
        %1370 = vmatprep.subr.mxu0 0.0
        %1371 = vmatpush1.msra.mxu0 0.0
        %1372 = vmatprep.subr.mxu0 0.0
        %1373 = vmatpush1.msra.mxu0 0.0
        %1374 = vmatprep.subr.mxu0 0.0
        %1375 = vmatpush1.msra.mxu0 0.0
        %1376 = vmatprep.subr.mxu0 0.0
        %1377 = vmatpush1.msra.mxu0 0.0
        %1378 = vmatprep.subr.mxu0 0.0
        %1379 = vmatpush1.msra.mxu0 0.0
        %1380 = vmatprep.subr.mxu0 0.0
        %1381 = vmatpush1.msra.mxu0 0.0
        %1382 = vmatprep.subr.mxu0 0.0
        %1383 = vmatpush1.msra.mxu0 0.0
        %1384 = vmatprep.subr.mxu0 0.0
        %1385 = vmatpush1.msra.mxu0 0.0
        %1386 = vmatprep.subr.mxu0 0.0
        %1387 = vmatpush1.msra.mxu0 0.0
        %1388 = vmatprep.subr.mxu0 0.0
        %1389 = vmatpush1.msra.mxu0 0.0
        %1390 = vmatprep.subr.mxu0 0.0
        %1391 = vmatpush1.msra.mxu0 0.0
        %1392 = vmatprep.subr.mxu0 0.0
        %1393 = vmatpush1.msra.mxu0 0.0
        %1394 = vmatprep.subr.mxu0 0.0
        %1395 = vmatpush1.msra.mxu0 0.0
        %1396 = vmatprep.subr.mxu0 0.0
        %1397 = vmatpush1.msra.mxu0 0.0
        %1398 = vmatprep.subr.mxu0 0.0
        %1399 = vmatpush1.msra.mxu0 0.0
        %1400 = vmatprep.subr.mxu0 0.0
        %1401 = vmatpush1.msra.mxu0 0.0
        %1402 = vmatprep.mubr.f32.mxu0 0.0
        %1403 = vmatmul.mubr.f32.gmra.mrb[0].mxu0 %v1257
        %v1404 = vpop.f32.mrb[0].mxu0
        %v1405 = vadd.f32 0.0, %v1404
        %v1406 = vpop.f32.mrb[0].mxu0
        %1407 = vdwg.mxu0
        %v1408 = vsub.f32 %v1138, %v1330
        %v1409 = vmul.f32 %v1408, %v1405
        %v1410 = vlaneseq
        %v1411 = vshrl.u32 %v1410, 7
        %v1412 = vsub.s32 3, %v1411
        %v1413 = vrot.slane %v485, %v1412
        %v1414 = vadd.f32 %v1409, %v1413
        %v1415 = vadd.f32 %v484, %v1414
        %1416 = vst.msk [vmem:[%s476] sm:$0xff] %vm506, %v1415
        %p1417 = scmp.lt.s32.totalorder %s27, 1
        %s1418 = scalar_select %p1417, %s27, 1
        %s1419 = smul.addr %s1418, 8
        %s1420 = scalar_lea.vmem %s11, %s1419
        // Predicated region
        $region85: #{local_residual_forward.1} parent=63 // pred_check
          %p1421 = pneg %p286
        $region86: #{local_residual_forward.1} parent=63 // pred_check_branch
          %1423 = sbr.rel (%p1421) target = $region88
        $region87: #{local_residual_forward.1} parent=63 // pred_region
          _
        $region88: #{local_residual_forward.1} parent=63 // pred_fallthru
          _
      $region64: #{local_residual_forward.1} parent=5 // pred_fallthru
        _
      %p1424 = scmp.le.s32.totalorder 2, %s22
      // Predicated region
      $region89: #{local_residual_forward.1} parent=5 // pred_check
        %p1425 = pneg %p1424
      $region90: #{local_residual_forward.1} parent=5 // pred_check_branch
        %1427 = sbr.rel (%p1425) target = $region92
      $region91: #{local_residual_forward.1} parent=5 // pred_region
        %s1428 = ssub.s32 %s22, 2
        // Predicated region
        $region93: #{local_residual_forward.1} parent=91 // pred_check
          %p1429 = pneg %p292
        $region94: #{local_residual_forward.1} parent=91 // pred_check_branch
          %1431 = sbr.rel (%p1429) target = $region96
        $region95: #{local_residual_forward.1} parent=91 // pred_region
          %p1432 = scmp.lt.s32.totalorder %s28, 1
          %s1433 = scalar_select %p1432, %s28, 1
          %s1434 = smul.addr %s1433, 8
          %s1435 = scalar_lea.vmem %s11, %s1434
        $region96: #{local_residual_forward.1} parent=91 // pred_fallthru
          _
      $region92: #{local_residual_forward.1} parent=5 // pred_fallthru
        _
    $region6: #{local_residual_forward.1} parent=1 // loop_footer
      %s26 = sadd.s32 1, %s22
    $region7: #{local_residual_forward.1} parent=1 // loop_footer_branch
      %21 = sbr.rel target = $region3
    $region8: #{local_residual_forward.1} parent=1 // loop_exit
      _
    %1436 = vsyncpa [#allocation3], 1
    %s1437 = scalar_lea.sflag [#allocation3], 1
    %1438 = vsyncpa %s1437, 1
    %1439 = vsyncpa [#allocation5], 1
    %1440 = vsyncpa [#allocation8], 1

</llo_original>
